<compile_context>
chip_gen: v7x
topology: tpu7x:2x2x1
jax: 0.10.0
libtpu: 0.0.40
codegen_flags: <defaults>
</compile_context>

<pallas_src>
import jax
import jax.numpy as jnp
from jax import lax
from jax.experimental import pallas as pl
from jax.experimental.pallas import tpu as pltpu


def _ln_rows(x, gamma, beta, eps=1e-5):
    """LayerNorm over the LAST axis (gamma/beta broadcast)."""
    mu = jnp.mean(x, axis=-1, keepdims=True)
    var = jnp.mean(jnp.square(x - mu), axis=-1, keepdims=True)
    return (x - mu) * lax.rsqrt(var + eps) * gamma + beta


def _ln_cols(xt, gamma_col, beta_col, eps=1e-5):
    """LayerNorm over axis 0 (feature-major / transposed layout); gamma,beta are (dh,1)."""
    mu = jnp.mean(xt, axis=0, keepdims=True)
    var = jnp.mean(jnp.square(xt - mu), axis=0, keepdims=True)
    return (xt - mu) * lax.rsqrt(var + eps) * gamma_col + beta_col


# ----------------------------------- kernel -----------------------------------

def _attention_kernel(x_ref, g_ref, b_ref,
                      wqkv_ref,
                      gk_ref, bk_ref, gv_ref, bv_ref,
                      wo_ref, bo_ref,
                      out_ref, map_ref,
                      qkv_sc, o_sc):
    h = pl.program_id(1)
    H, dh, _ = o_sc.shape
    inner = H * dh
    scale = dh ** -0.5
    cdt = wqkv_ref.dtype                                   # MXU operand dtype (bf16)

    # ---- once per batch row (head step 0): LayerNorm(dim) + fused qkv projection ----
    @pl.when(h == 0)
    def _():
        x = x_ref[0]                                       # (N, D) f32
        xn = _ln_rows(x, g_ref[...], b_ref[...])           # f32
        # One lane-dense matmul for q,k,v of ALL heads, in feature-major (transposed)
        # orientation so per-head tiles are sublane slices of the scratch.
        qkv_sc[...] = jnp.einsum('ed,nd->en', wqkv_ref[...], xn.astype(cdt),
                                 preferred_element_type=jnp.float32)   # (3*inner, N)

    # ---- per-head attention (all 2-D, MXU-standard / trans_b contractions) ----
    off = pl.multiple_of(h * dh, dh)
    q_t = qkv_sc[pl.ds(off, dh), :]                                    # (dh, N) f32
    k_t = _ln_cols(qkv_sc[pl.ds(inner + off, dh), :], gk_ref[...], bk_ref[...])
    v_t = _ln_cols(qkv_sc[pl.ds(2 * inner + off, dh), :], gv_ref[...], bv_ref[...])

    q = q_t.T                                              # (N, dh), tiny 2-D transpose
    s = jnp.dot(q.astype(cdt), k_t.astype(cdt),
                preferred_element_type=jnp.float32) * scale            # scale post-matmul, f32
    s_max = jnp.max(s, axis=-1, keepdims=True)
    e = jnp.exp(s - s_max)
    inv = 1.0 / jnp.sum(e, axis=-1, keepdims=True)         # exact reciprocal: map parity
    attn = e * inv                                         # (N, N) f32

    map_ref[0, 0] = attn                                   # per-(b,h) block store

    # attn @ v in transposed orientation: (dh, N_k) x (N_q, N_k)^T -> (dh, N_q)
    o_sc[h] = jnp.einsum('cm,nm->cn', v_t.astype(cdt), attn.astype(cdt),
                         preferred_element_type=jnp.float32)

    # ---- once per batch row (last head): fused output projection over ALL heads ----
    @pl.when(h == H - 1)
    def _():
        # Gather per-head results (static indices) into (inner, N), one contraction
        # over the full inner = H*dh dim -> no per-head narrow projections.
        o_flat = jnp.concatenate([o_sc[j] for j in range(H)], axis=0)  # (inner, N)
        out = jnp.dot(o_flat.T.astype(cdt), wo_ref[...],
                      preferred_element_type=jnp.float32) + bo_ref[...]
        out_ref[0] = out
    # dropout (p=0.0 / eval mode) is an identity and is omitted.


# ----------------------------------- wrapper ----------------------------------

def attention_forward(x, params, *, heads, dim_head, mxu_dtype=jnp.bfloat16):
    B, N, D = x.shape
    inner = heads * dim_head

    # Weight plumbing (free, outside the kernel): single transposed qkv slab, bf16
    # MXU operands, per-head LN params in column orientation.
    w_qkv_t = params["w_qkv"].T.astype(mxu_dtype)          # (3*inner, D)
    w_out = params["w_out"].astype(mxu_dtype)              # (inner, D)
    gk = params["lnk_g"].reshape(dim_head, 1)
    bk = params["lnk_b"].reshape(dim_head, 1)
    gv = params["lnv_g"].reshape(dim_head, 1)
    bv = params["lnv_b"].reshape(dim_head, 1)

    def full_spec(a):
        nd = a.ndim
        return pl.BlockSpec(a.shape, lambda b, h, _nd=nd: (0,) * _nd)

    out, attn_map = pl.pallas_call(
        _attention_kernel,
        out_shape=(jax.ShapeDtypeStruct((B, N, D), jnp.float32),
                   jax.ShapeDtypeStruct((B, heads, N, N), jnp.float32)),
        grid=(B, heads),
        in_specs=[
            pl.BlockSpec((1, N, D), lambda b, h: (b, 0, 0)),   # x (fetched once per b)
            full_spec(params["ln_g"]), full_spec(params["ln_b"]),
            full_spec(w_qkv_t),
            full_spec(gk), full_spec(bk), full_spec(gv), full_spec(bv),
            full_spec(w_out), full_spec(params["b_out"]),
        ],
        out_specs=(pl.BlockSpec((1, N, D), lambda b, h: (b, 0, 0)),       # out (reduced over h)
                   pl.BlockSpec((1, 1, N, N), lambda b, h: (b, h, 0, 0))),  # attn map per (b,h)
        scratch_shapes=[
            pltpu.VMEM((3 * inner, N), jnp.float32),   # staged qkv (feature-major)
            pltpu.VMEM((heads, dim_head, N), jnp.float32),  # per-head attn@v results
        ],
        compiler_params=pltpu.CompilerParams(
            dimension_semantics=("parallel", "arbitrary"),   # batch feeds both v7x TCs;
            vmem_limit_bytes=32 * 1024 * 1024),              # head axis is a reduction
    )(x, params["ln_g"], params["ln_b"], w_qkv_t,
      gk, bk, gv, bv, w_out, params["b_out"])
    return out, attn_map


# ------------------------- pure-JAX reference (f32) ----------------------------

def attention_reference(x, params, *, heads, dim_head):
    B, N, D = x.shape
    inner = heads * dim_head
    scale = dim_head ** -0.5
    xn = _ln_rows(x, params["ln_g"], params["ln_b"])
    qkv = xn @ params["w_qkv"]
    q, k, v = jnp.split(qkv, 3, axis=-1)
    to_heads = lambda t: t.reshape(B, N, heads, dim_head).transpose(0, 2, 1, 3)
    q, k, v = to_heads(q), to_heads(k), to_heads(v)
    k = _ln_rows(k, params["lnk_g"], params["lnk_b"])
    v = _ln_rows(v, params["lnv_g"], params["lnv_b"])
    s = jnp.einsum('bhnc,bhmc->bhnm', q, k) * scale
    attn = jax.nn.softmax(s, axis=-1)
    o = jnp.einsum('bhnm,bhmc->bhnc', attn, v)
    o = o.transpose(0, 2, 1, 3).reshape(B, N, inner)
    out = o @ params["w_out"] + params["b_out"]
    return out, attn


# --------------------------------- parameters ----------------------------------

def init_params(key, dim, heads, dim_head):
    inner = heads * dim_head
    ks = jax.random.split(key, 9)
    rn = lambda k, shape, s=0.02: s * jax.random.normal(k, shape, jnp.float32)
    return {
        "ln_g": 1.0 + rn(ks[0], (1, dim), 0.1),
        "ln_b": rn(ks[1], (1, dim), 0.1),
        "w_qkv": rn(ks[2], (dim, 3 * inner)),               # to_qkv (no bias)
        "lnk_g": 1.0 + rn(ks[3], (1, dim_head), 0.1),
        "lnk_b": rn(ks[4], (1, dim_head), 0.1),
        "lnv_g": 1.0 + rn(ks[5], (1, dim_head), 0.1),
        "lnv_b": rn(ks[6], (1, dim_head), 0.1),
        "w_out": rn(ks[7], (inner, dim)),                   # to_out Linear
        "b_out": rn(ks[8], (1, dim), 0.1),
    }


# ----------------------------------- main --------------------------------------

if __name__ == "__main__":
    # Small shapes consistent with the module: dim=32, heads=4, dim_head=16,
    # batch=2, seq=8.
    dim, heads, dim_head = 32, 4, 16
    B, N = 2, 8

    key = jax.random.PRNGKey(0)
    kx, kp = jax.random.split(key)
    x = jax.random.normal(kx, (B, N, dim), jnp.float32)
    params = init_params(kp, dim, heads, dim_head)

    out, attn_map = attention_forward(x, params, heads=heads, dim_head=dim_head)
    out = jax.block_until_ready(out)
    attn_map = jax.block_until_ready(attn_map)

    assert out.shape == (B, N, dim)
    assert attn_map.shape == (B, heads, N, N)

    # Correctness check against the pure-JAX f32 reference (tolerance covers the
    # bf16 MXU operands; accumulation / softmax / LayerNorm are f32 in the kernel).
    ref_out, ref_map = attention_reference(x, params, heads=heads, dim_head=dim_head)
    assert jnp.allclose(out, ref_out, rtol=2e-2, atol=2e-2), \
        float(jnp.max(jnp.abs(out - ref_out)))
    assert jnp.allclose(attn_map, ref_map, rtol=2e-2, atol=2e-2), \
        float(jnp.max(jnp.abs(attn_map - ref_map)))

    print("KERNEL_OK")
</pallas_src>

<mosaic_0001>
module attributes {stable_mosaic.version = 11 : i64} {
  func.func @_attention_kernel(%arg0: i32, %arg1: i32, %arg2: memref<1x8x32xf32, #tpu.memory_space<vmem>>, %arg3: memref<1x32xf32, #tpu.memory_space<vmem>>, %arg4: memref<1x32xf32, #tpu.memory_space<vmem>>, %arg5: memref<192x32xbf16, #tpu.memory_space<vmem>>, %arg6: memref<16x1xf32, #tpu.memory_space<vmem>>, %arg7: memref<16x1xf32, #tpu.memory_space<vmem>>, %arg8: memref<16x1xf32, #tpu.memory_space<vmem>>, %arg9: memref<16x1xf32, #tpu.memory_space<vmem>>, %arg10: memref<64x32xbf16, #tpu.memory_space<vmem>>, %arg11: memref<1x32xf32, #tpu.memory_space<vmem>>, %arg12: memref<1x8x32xf32, #tpu.memory_space<vmem>>, %arg13: memref<1x1x8x8xf32, #tpu.memory_space<vmem>>, %arg14: memref<192x8xf32, #tpu.memory_space<vmem>>, %arg15: memref<4x16x8xf32, #tpu.memory_space<vmem>>) attributes {dimension_semantics = [#tpu.dimension_semantics<parallel>, #tpu.dimension_semantics<arbitrary>], iteration_bounds = array<i64: 2, 4>, scalar_prefetch = 0 : i64, scratch_operands = 2 : i64, tpu.core_type = #tpu.core_type<tc>, window_params = [{transform_indices = @transform_0, window_bounds = array<i64: 1, 8, 32>}, {pipeline_mode = #tpu.pipeline_mode<synchronous>, transform_indices = @transform_1, window_bounds = array<i64: 1, 32>}, {pipeline_mode = #tpu.pipeline_mode<synchronous>, transform_indices = @transform_2, window_bounds = array<i64: 1, 32>}, {pipeline_mode = #tpu.pipeline_mode<synchronous>, transform_indices = @transform_3, window_bounds = array<i64: 192, 32>}, {pipeline_mode = #tpu.pipeline_mode<synchronous>, transform_indices = @transform_4, window_bounds = array<i64: 16, 1>}, {pipeline_mode = #tpu.pipeline_mode<synchronous>, transform_indices = @transform_5, window_bounds = array<i64: 16, 1>}, {pipeline_mode = #tpu.pipeline_mode<synchronous>, transform_indices = @transform_6, window_bounds = array<i64: 16, 1>}, {pipeline_mode = #tpu.pipeline_mode<synchronous>, transform_indices = @transform_7, window_bounds = array<i64: 16, 1>}, {pipeline_mode = #tpu.pipeline_mode<synchronous>, transform_indices = @transform_8, window_bounds = array<i64: 64, 32>}, {pipeline_mode = #tpu.pipeline_mode<synchronous>, transform_indices = @transform_9, window_bounds = array<i64: 1, 32>}, {transform_indices = @transform_10, window_bounds = array<i64: 1, 8, 32>}, {transform_indices = @transform_11, window_bounds = array<i64: 1, 1, 8, 8>}]} {
    %c0_i32 = arith.constant 0 : i32
    %0 = arith.cmpi eq, %arg1, %c0_i32 : i32
    %1 = arith.extui %0 : i1 to i32
    %c0_i32_0 = arith.constant 0 : i32
    %2 = arith.cmpi ne, %1, %c0_i32_0 : i32
    scf.if %2 {
      %c0_33 = arith.constant 0 : index
      %c0_34 = arith.constant 0 : index
      %c0_35 = arith.constant 0 : index
      %91 = vector.load %arg2[%c0_33, %c0_34, %c0_35] : memref<1x8x32xf32, #tpu.memory_space<vmem>>, vector<1x8x32xf32>
      %92 = vector.shape_cast %91 : vector<1x8x32xf32> to vector<8x32xf32>
      %c0_36 = arith.constant 0 : index
      %c0_37 = arith.constant 0 : index
      %93 = vector.load %arg3[%c0_36, %c0_37] : memref<1x32xf32, #tpu.memory_space<vmem>>, vector<1x32xf32>
      %c0_38 = arith.constant 0 : index
      %c0_39 = arith.constant 0 : index
      %94 = vector.load %arg4[%c0_38, %c0_39] : memref<1x32xf32, #tpu.memory_space<vmem>>, vector<1x32xf32>
      %cst_40 = arith.constant dense<0.000000e+00> : vector<8xf32>
      %95 = vector.multi_reduction <add>, %92, %cst_40 [1] : vector<8x32xf32> to vector<8xf32>
      %96 = vector.shape_cast %95 : vector<8xf32> to vector<8x1xf32>
      %cst_41 = arith.constant 3.200000e+01 : f32
      %97 = vector.broadcast %cst_41 : f32 to vector<8x1xf32>
      %98 = arith.divf %96, %97 : vector<8x1xf32>
      %99 = vector.broadcast %98 : vector<8x1xf32> to vector<8x32xf32>
      %100 = arith.subf %92, %99 : vector<8x32xf32>
      %101 = arith.mulf %100, %100 : vector<8x32xf32>
      %cst_42 = arith.constant dense<0.000000e+00> : vector<8xf32>
      %102 = vector.multi_reduction <add>, %101, %cst_42 [1] : vector<8x32xf32> to vector<8xf32>
      %103 = vector.shape_cast %102 : vector<8xf32> to vector<8x1xf32>
      %cst_43 = arith.constant 3.200000e+01 : f32
      %104 = vector.broadcast %cst_43 : f32 to vector<8x1xf32>
      %105 = arith.divf %103, %104 : vector<8x1xf32>
      %106 = vector.broadcast %98 : vector<8x1xf32> to vector<8x32xf32>
      %107 = arith.subf %92, %106 : vector<8x32xf32>
      %cst_44 = arith.constant 9.99999974E-6 : f32
      %108 = vector.broadcast %cst_44 : f32 to vector<8x1xf32>
      %109 = arith.addf %105, %108 : vector<8x1xf32>
      %110 = math.rsqrt %109 : vector<8x1xf32>
      %111 = vector.broadcast %110 : vector<8x1xf32> to vector<8x32xf32>
      %112 = arith.mulf %107, %111 : vector<8x32xf32>
      %113 = vector.broadcast %93 : vector<1x32xf32> to vector<8x32xf32>
      %114 = arith.mulf %112, %113 : vector<8x32xf32>
      %115 = vector.broadcast %94 : vector<1x32xf32> to vector<8x32xf32>
      %116 = arith.addf %114, %115 : vector<8x32xf32>
      %c0_45 = arith.constant 0 : index
      %c0_46 = arith.constant 0 : index
      %117 = vector.load %arg5[%c0_45, %c0_46] : memref<192x32xbf16, #tpu.memory_space<vmem>>, vector<192x32xbf16>
      %118 = arith.truncf %116 : vector<8x32xf32> to vector<8x32xbf16>
      "tpu.trace_start"() <{level = 10 : i32, message = "ed,nd->en"}> : () -> ()
      %cst_47 = arith.constant dense<0.000000e+00> : vector<192x8xf32>
      %119 = tpu.matmul %117, %118, %cst_47 {dimension_numbers = #tpu.dot_dimension_numbers<[1], [1], [0], [0], [0, 0, 1, 0], [], []>} : vector<192x32xbf16>, vector<8x32xbf16>, vector<192x8xf32> -> vector<192x8xf32>
      "tpu.trace_stop"() : () -> ()
      %c0_48 = arith.constant 0 : index
      %c0_49 = arith.constant 0 : index
      %120 = vector.load %arg14[%c0_48, %c0_49] : memref<192x8xf32, #tpu.memory_space<vmem>>, vector<192x8xf32>
      tpu.vector_store %arg14[%c0_48, %c0_49], %119 {strides = array<i32>} : memref<192x8xf32, #tpu.memory_space<vmem>>, vector<192x8xf32>,
    } else {
    }
    %c16_i32 = arith.constant 16 : i32
    %3 = arith.muli %arg1, %c16_i32 : i32
    %4 = tpu.assume_multiple %3, 16 : i32
    %5 = arith.index_cast %4 : i32 to index
    %c0 = arith.constant 0 : index
    %6 = vector.load %arg14[%5, %c0] : memref<192x8xf32, #tpu.memory_space<vmem>>, vector<16x8xf32>
    %c64_i32 = arith.constant 64 : i32
    %7 = arith.addi %c64_i32, %4 : i32
    %8 = arith.index_cast %7 : i32 to index
    %c0_1 = arith.constant 0 : index
    %9 = vector.load %arg14[%8, %c0_1] : memref<192x8xf32, #tpu.memory_space<vmem>>, vector<16x8xf32>
    %c0_2 = arith.constant 0 : index
    %c0_3 = arith.constant 0 : index
    %10 = vector.load %arg6[%c0_2, %c0_3] : memref<16x1xf32, #tpu.memory_space<vmem>>, vector<16x1xf32>
    %c0_4 = arith.constant 0 : index
    %c0_5 = arith.constant 0 : index
    %11 = vector.load %arg7[%c0_4, %c0_5] : memref<16x1xf32, #tpu.memory_space<vmem>>, vector<16x1xf32>
    %cst = arith.constant dense<0.000000e+00> : vector<8xf32>
    %12 = vector.multi_reduction <add>, %9, %cst [0] : vector<16x8xf32> to vector<8xf32>
    %13 = vector.shape_cast %12 : vector<8xf32> to vector<1x8xf32>
    %cst_6 = arith.constant 1.600000e+01 : f32
    %14 = vector.broadcast %cst_6 : f32 to vector<1x8xf32>
    %15 = arith.divf %13, %14 : vector<1x8xf32>
    %16 = vector.broadcast %15 : vector<1x8xf32> to vector<16x8xf32>
    %17 = arith.subf %9, %16 : vector<16x8xf32>
    %18 = arith.mulf %17, %17 : vector<16x8xf32>
    %cst_7 = arith.constant dense<0.000000e+00> : vector<8xf32>
    %19 = vector.multi_reduction <add>, %18, %cst_7 [0] : vector<16x8xf32> to vector<8xf32>
    %20 = vector.shape_cast %19 : vector<8xf32> to vector<1x8xf32>
    %cst_8 = arith.constant 1.600000e+01 : f32
    %21 = vector.broadcast %cst_8 : f32 to vector<1x8xf32>
    %22 = arith.divf %20, %21 : vector<1x8xf32>
    %23 = vector.broadcast %15 : vector<1x8xf32> to vector<16x8xf32>
    %24 = arith.subf %9, %23 : vector<16x8xf32>
    %cst_9 = arith.constant 9.99999974E-6 : f32
    %25 = vector.broadcast %cst_9 : f32 to vector<1x8xf32>
    %26 = arith.addf %22, %25 : vector<1x8xf32>
    %27 = math.rsqrt %26 : vector<1x8xf32>
    %28 = vector.broadcast %27 : vector<1x8xf32> to vector<16x8xf32>
    %29 = arith.mulf %24, %28 : vector<16x8xf32>
    %30 = vector.broadcast %10 : vector<16x1xf32> to vector<16x8xf32>
    %31 = arith.mulf %29, %30 : vector<16x8xf32>
    %32 = vector.broadcast %11 : vector<16x1xf32> to vector<16x8xf32>
    %33 = arith.addf %31, %32 : vector<16x8xf32>
    %c128_i32 = arith.constant 128 : i32
    %34 = arith.addi %c128_i32, %4 : i32
    %35 = arith.index_cast %34 : i32 to index
    %c0_10 = arith.constant 0 : index
    %36 = vector.load %arg14[%35, %c0_10] : memref<192x8xf32, #tpu.memory_space<vmem>>, vector<16x8xf32>
    %c0_11 = arith.constant 0 : index
    %c0_12 = arith.constant 0 : index
    %37 = vector.load %arg8[%c0_11, %c0_12] : memref<16x1xf32, #tpu.memory_space<vmem>>, vector<16x1xf32>
    %c0_13 = arith.constant 0 : index
    %c0_14 = arith.constant 0 : index
    %38 = vector.load %arg9[%c0_13, %c0_14] : memref<16x1xf32, #tpu.memory_space<vmem>>, vector<16x1xf32>
    %cst_15 = arith.constant dense<0.000000e+00> : vector<8xf32>
    %39 = vector.multi_reduction <add>, %36, %cst_15 [0] : vector<16x8xf32> to vector<8xf32>
    %40 = vector.shape_cast %39 : vector<8xf32> to vector<1x8xf32>
    %cst_16 = arith.constant 1.600000e+01 : f32
    %41 = vector.broadcast %cst_16 : f32 to vector<1x8xf32>
    %42 = arith.divf %40, %41 : vector<1x8xf32>
    %43 = vector.broadcast %42 : vector<1x8xf32> to vector<16x8xf32>
    %44 = arith.subf %36, %43 : vector<16x8xf32>
    %45 = arith.mulf %44, %44 : vector<16x8xf32>
    %cst_17 = arith.constant dense<0.000000e+00> : vector<8xf32>
    %46 = vector.multi_reduction <add>, %45, %cst_17 [0] : vector<16x8xf32> to vector<8xf32>
    %47 = vector.shape_cast %46 : vector<8xf32> to vector<1x8xf32>
    %cst_18 = arith.constant 1.600000e+01 : f32
    %48 = vector.broadcast %cst_18 : f32 to vector<1x8xf32>
    %49 = arith.divf %47, %48 : vector<1x8xf32>
    %50 = vector.broadcast %42 : vector<1x8xf32> to vector<16x8xf32>
    %51 = arith.subf %36, %50 : vector<16x8xf32>
    %cst_19 = arith.constant 9.99999974E-6 : f32
    %52 = vector.broadcast %cst_19 : f32 to vector<1x8xf32>
    %53 = arith.addf %49, %52 : vector<1x8xf32>
    %54 = math.rsqrt %53 : vector<1x8xf32>
    %55 = vector.broadcast %54 : vector<1x8xf32> to vector<16x8xf32>
    %56 = arith.mulf %51, %55 : vector<16x8xf32>
    %57 = vector.broadcast %37 : vector<16x1xf32> to vector<16x8xf32>
    %58 = arith.mulf %56, %57 : vector<16x8xf32>
    %59 = vector.broadcast %38 : vector<16x1xf32> to vector<16x8xf32>
    %60 = arith.addf %58, %59 : vector<16x8xf32>
    %61 = tpu.transpose %6, [1, 0] : vector<16x8xf32> -> vector<8x16xf32>
    %62 = arith.truncf %61 : vector<8x16xf32> to vector<8x16xbf16>
    %63 = arith.truncf %33 : vector<16x8xf32> to vector<16x8xbf16>
    %cst_20 = arith.constant dense<0.000000e+00> : vector<8x8xf32>
    %64 = tpu.matmul %62, %63, %cst_20 {dimension_numbers = #tpu.dot_dimension_numbers<[1], [0], [0], [1], [0, 0, 1, 1], [], []>} : vector<8x16xbf16>, vector<16x8xbf16>, vector<8x8xf32> -> vector<8x8xf32>
    %cst_21 = arith.constant 2.500000e-01 : f32
    %65 = vector.broadcast %cst_21 : f32 to vector<8x8xf32>
    %66 = arith.mulf %64, %65 : vector<8x8xf32>
    %cst_22 = arith.constant dense<0xFF800000> : vector<8xf32>
    %67 = vector.multi_reduction <maximumf>, %66, %cst_22 [1] : vector<8x8xf32> to vector<8xf32>
    %68 = vector.shape_cast %67 : vector<8xf32> to vector<8x1xf32>
    %69 = vector.broadcast %68 : vector<8x1xf32> to vector<8x8xf32>
    %70 = arith.subf %66, %69 : vector<8x8xf32>
    %71 = math.exp %70 : vector<8x8xf32>
    %cst_23 = arith.constant dense<0.000000e+00> : vector<8xf32>
    %72 = vector.multi_reduction <add>, %71, %cst_23 [1] : vector<8x8xf32> to vector<8xf32>
    %73 = vector.shape_cast %72 : vector<8xf32> to vector<8x1xf32>
    %cst_24 = arith.constant 1.000000e+00 : f32
    %74 = vector.broadcast %cst_24 : f32 to vector<8x1xf32>
    %75 = arith.divf %74, %73 : vector<8x1xf32>
    %76 = vector.broadcast %75 : vector<8x1xf32> to vector<8x8xf32>
    %77 = arith.mulf %71, %76 : vector<8x8xf32>
    %c0_25 = arith.constant 0 : index
    %c0_26 = arith.constant 0 : index
    %c0_27 = arith.constant 0 : index
    %c0_28 = arith.constant 0 : index
    %78 = vector.load %arg13[%c0_25, %c0_26, %c0_27, %c0_28] : memref<1x1x8x8xf32, #tpu.memory_space<vmem>>, vector<1x1x8x8xf32>
    %79 = vector.shape_cast %78 : vector<1x1x8x8xf32> to vector<8x8xf32>
    %80 = vector.shape_cast %77 : vector<8x8xf32> to vector<1x1x8x8xf32>
    tpu.vector_store %arg13[%c0_25, %c0_26, %c0_27, %c0_28], %80 {strides = array<i32>} : memref<1x1x8x8xf32, #tpu.memory_space<vmem>>, vector<1x1x8x8xf32>,
    %81 = arith.truncf %60 : vector<16x8xf32> to vector<16x8xbf16>
    %82 = arith.truncf %77 : vector<8x8xf32> to vector<8x8xbf16>
    "tpu.trace_start"() <{level = 10 : i32, message = "cm,nm->cn"}> : () -> ()
    %cst_29 = arith.constant dense<0.000000e+00> : vector<16x8xf32>
    %83 = tpu.matmul %81, %82, %cst_29 {dimension_numbers = #tpu.dot_dimension_numbers<[1], [1], [0], [0], [0, 0, 1, 0], [], []>} : vector<16x8xbf16>, vector<8x8xbf16>, vector<16x8xf32> -> vector<16x8xf32>
    "tpu.trace_stop"() : () -> ()
    %84 = arith.index_cast %arg1 : i32 to index
    %c0_30 = arith.constant 0 : index
    %c0_31 = arith.constant 0 : index
    %85 = vector.load %arg15[%84, %c0_30, %c0_31] : memref<4x16x8xf32, #tpu.memory_space<vmem>>, vector<1x16x8xf32>
    %86 = vector.shape_cast %85 : vector<1x16x8xf32> to vector<16x8xf32>
    %87 = vector.shape_cast %83 : vector<16x8xf32> to vector<1x16x8xf32>
    tpu.vector_store %arg15[%84, %c0_30, %c0_31], %87 {strides = array<i32>} : memref<4x16x8xf32, #tpu.memory_space<vmem>>, vector<1x16x8xf32>,
    %c3_i32 = arith.constant 3 : i32
    %88 = arith.cmpi eq, %arg1, %c3_i32 : i32
    %89 = arith.extui %88 : i1 to i32
    %c0_i32_32 = arith.constant 0 : i32
    %90 = arith.cmpi ne, %89, %c0_i32_32 : i32
    scf.if %90 {
      %c0_33 = arith.constant 0 : index
      %c0_34 = arith.constant 0 : index
      %c0_35 = arith.constant 0 : index
      %91 = vector.load %arg15[%c0_33, %c0_34, %c0_35] : memref<4x16x8xf32, #tpu.memory_space<vmem>>, vector<1x16x8xf32>
      %92 = vector.shape_cast %91 : vector<1x16x8xf32> to vector<16x8xf32>
      %c1 = arith.constant 1 : index
      %c0_36 = arith.constant 0 : index
      %c0_37 = arith.constant 0 : index
      %93 = vector.load %arg15[%c1, %c0_36, %c0_37] : memref<4x16x8xf32, #tpu.memory_space<vmem>>, vector<1x16x8xf32>
      %94 = vector.shape_cast %93 : vector<1x16x8xf32> to vector<16x8xf32>
      %c2 = arith.constant 2 : index
      %c0_38 = arith.constant 0 : index
      %c0_39 = arith.constant 0 : index
      %95 = vector.load %arg15[%c2, %c0_38, %c0_39] : memref<4x16x8xf32, #tpu.memory_space<vmem>>, vector<1x16x8xf32>
      %96 = vector.shape_cast %95 : vector<1x16x8xf32> to vector<16x8xf32>
      %c3 = arith.constant 3 : index
      %c0_40 = arith.constant 0 : index
      %c0_41 = arith.constant 0 : index
      %97 = vector.load %arg15[%c3, %c0_40, %c0_41] : memref<4x16x8xf32, #tpu.memory_space<vmem>>, vector<1x16x8xf32>
      %98 = vector.shape_cast %97 : vector<1x16x8xf32> to vector<16x8xf32>
      %99 = tpu.concatenate %92, %94, %96, %98 in 0 : vector<16x8xf32>, vector<16x8xf32>, vector<16x8xf32>, vector<16x8xf32> -> vector<64x8xf32>
      %100 = tpu.transpose %99, [1, 0] : vector<64x8xf32> -> vector<8x64xf32>
      %101 = arith.truncf %100 : vector<8x64xf32> to vector<8x64xbf16>
      %c0_42 = arith.constant 0 : index
      %c0_43 = arith.constant 0 : index
      %102 = vector.load %arg10[%c0_42, %c0_43] : memref<64x32xbf16, #tpu.memory_space<vmem>>, vector<64x32xbf16>
      %cst_44 = arith.constant dense<0.000000e+00> : vector<8x32xf32>
      %103 = tpu.matmul %101, %102, %cst_44 {dimension_numbers = #tpu.dot_dimension_numbers<[1], [0], [0], [1], [0, 0, 1, 1], [], []>} : vector<8x64xbf16>, vector<64x32xbf16>, vector<8x32xf32> -> vector<8x32xf32>
      %c0_45 = arith.constant 0 : index
      %c0_46 = arith.constant 0 : index
      %104 = vector.load %arg11[%c0_45, %c0_46] : memref<1x32xf32, #tpu.memory_space<vmem>>, vector<1x32xf32>
      %105 = vector.broadcast %104 : vector<1x32xf32> to vector<8x32xf32>
      %106 = arith.addf %103, %105 : vector<8x32xf32>
      %c0_47 = arith.constant 0 : index
      %c0_48 = arith.constant 0 : index
      %c0_49 = arith.constant 0 : index
      %107 = vector.load %arg12[%c0_47, %c0_48, %c0_49] : memref<1x8x32xf32, #tpu.memory_space<vmem>>, vector<1x8x32xf32>
      %108 = vector.shape_cast %107 : vector<1x8x32xf32> to vector<8x32xf32>
      %109 = vector.shape_cast %106 : vector<8x32xf32> to vector<1x8x32xf32>
      tpu.vector_store %arg12[%c0_47, %c0_48, %c0_49], %109 {strides = array<i32>} : memref<1x8x32xf32, #tpu.memory_space<vmem>>, vector<1x8x32xf32>,
    } else {
    }
    return
  }
  func.func @transform_0(%arg0: i32, %arg1: i32) -> (i32, i32, i32) {
    %c0_i32 = arith.constant 0 : i32
    %c0_i32_0 = arith.constant 0 : i32
    %c0_i32_1 = arith.constant 0 : i32
    return %arg0, %c0_i32, %c0_i32_0 : i32, i32, i32
  }
  func.func @transform_1(%arg0: i32, %arg1: i32) -> (i32, i32) {
    %c0_i32 = arith.constant 0 : i32
    %c0_i32_0 = arith.constant 0 : i32
    %c0_i32_1 = arith.constant 0 : i32
    return %c0_i32, %c0_i32_0 : i32, i32
  }
  func.func @transform_2(%arg0: i32, %arg1: i32) -> (i32, i32) {
    %c0_i32 = arith.constant 0 : i32
    %c0_i32_0 = arith.constant 0 : i32
    %c0_i32_1 = arith.constant 0 : i32
    return %c0_i32, %c0_i32_0 : i32, i32
  }
  func.func @transform_3(%arg0: i32, %arg1: i32) -> (i32, i32) {
    %c0_i32 = arith.constant 0 : i32
    %c0_i32_0 = arith.constant 0 : i32
    %c0_i32_1 = arith.constant 0 : i32
    return %c0_i32, %c0_i32_0 : i32, i32
  }
  func.func @transform_4(%arg0: i32, %arg1: i32) -> (i32, i32) {
    %c0_i32 = arith.constant 0 : i32
    %c0_i32_0 = arith.constant 0 : i32
    %c0_i32_1 = arith.constant 0 : i32
    return %c0_i32, %c0_i32_0 : i32, i32
  }
  func.func @transform_5(%arg0: i32, %arg1: i32) -> (i32, i32) {
    %c0_i32 = arith.constant 0 : i32
    %c0_i32_0 = arith.constant 0 : i32
    %c0_i32_1 = arith.constant 0 : i32
    return %c0_i32, %c0_i32_0 : i32, i32
  }
  func.func @transform_6(%arg0: i32, %arg1: i32) -> (i32, i32) {
    %c0_i32 = arith.constant 0 : i32
    %c0_i32_0 = arith.constant 0 : i32
    %c0_i32_1 = arith.constant 0 : i32
    return %c0_i32, %c0_i32_0 : i32, i32
  }
  func.func @transform_7(%arg0: i32, %arg1: i32) -> (i32, i32) {
    %c0_i32 = arith.constant 0 : i32
    %c0_i32_0 = arith.constant 0 : i32
    %c0_i32_1 = arith.constant 0 : i32
    return %c0_i32, %c0_i32_0 : i32, i32
  }
  func.func @transform_8(%arg0: i32, %arg1: i32) -> (i32, i32) {
    %c0_i32 = arith.constant 0 : i32
    %c0_i32_0 = arith.constant 0 : i32
    %c0_i32_1 = arith.constant 0 : i32
    return %c0_i32, %c0_i32_0 : i32, i32
  }
  func.func @transform_9(%arg0: i32, %arg1: i32) -> (i32, i32) {
    %c0_i32 = arith.constant 0 : i32
    %c0_i32_0 = arith.constant 0 : i32
    %c0_i32_1 = arith.constant 0 : i32
    return %c0_i32, %c0_i32_0 : i32, i32
  }
  func.func @transform_10(%arg0: i32, %arg1: i32) -> (i32, i32, i32) {
    %c0_i32 = arith.constant 0 : i32
    %c0_i32_0 = arith.constant 0 : i32
    %c0_i32_1 = arith.constant 0 : i32
    return %arg0, %c0_i32, %c0_i32_0 : i32, i32, i32
  }
  func.func @transform_11(%arg0: i32, %arg1: i32) -> (i32, i32, i32, i32) {
    %c0_i32 = arith.constant 0 : i32
    %c0_i32_0 = arith.constant 0 : i32
    %c0_i32_1 = arith.constant 0 : i32
    return %arg0, %arg1, %c0_i32, %c0_i32_0 : i32, i32, i32, i32
  }
}

</mosaic_0001>

<llo_original>
// kernel: tpu_custom_call.1
$region0: #{tpu_custom_call.1}
  #allocation0 [shape = 'u32[]', space=smem, size = 0x4, offset = 0x4, fixed_abs, tag = 'smem constant byte address 0x4 - core index']
  #allocation1 [shape = 'u32[144,128]{1,0:T(1,128)}', space=vmem, size = 0x12000, scoped, tag = 'internal scratch']
  #allocation2 [shape = 'f32[192,8]{1,0:T(8,128)}', space=vmem, size = 0x18000, scoped, tag = 'scratch operand']
  #allocation3 [shape = 'f32[4,16,8]{2,1,0:T(8,128)}', space=vmem, size = 0x8000, scoped, tag = 'scratch operand']
  %s0 = inlined_call_operand.vmem [shape: f32[2,8,32], index: 0, kind: input, shape index: {}]
  %s1 = inlined_call_operand.vmem [shape: f32[1,32], index: 1, kind: input, shape index: {}]
  %s2 = inlined_call_operand.vmem [shape: f32[1,32], index: 2, kind: input, shape index: {}]
  %s3 = inlined_call_operand.vmem [shape: bf16[192,32], index: 3, kind: input, shape index: {}]
  %s4 = inlined_call_operand.vmem [shape: f32[16,1], index: 4, kind: input, shape index: {}]
  %s5 = inlined_call_operand.vmem [shape: f32[16,1], index: 5, kind: input, shape index: {}]
  %s6 = inlined_call_operand.vmem [shape: f32[16,1], index: 6, kind: input, shape index: {}]
  %s7 = inlined_call_operand.vmem [shape: f32[16,1], index: 7, kind: input, shape index: {}]
  %s8 = inlined_call_operand.vmem [shape: bf16[64,32], index: 8, kind: input, shape index: {}]
  %s9 = inlined_call_operand.vmem [shape: f32[1,32], index: 9, kind: input, shape index: {}]
  %s10 = inlined_call_operand.hbm [shape: f32[2,8,32], index: 10, kind: output, shape index: {0}]
  %s11 = inlined_call_operand.hbm [shape: f32[2,4,8,8], index: 11, kind: output, shape index: {1}]
  %12 = xla_tuple %s10, %s11
  %s13 = sld [smem:[#allocation0]]
  $region89: #{tpu_custom_call.1} parent=0
    _
  %s15 = ssub.s32 1, %s13
  %s16 = scalar_select 0, %s15, %s13
  $region1: #{tpu_custom_call.1} parent=0
    #allocation4 [shape = 'u8[8192]{0}', space=vmem, size = 0x2000, scoped, tag = 'output window, operand 0']
    #allocation5 [shape = 's32[2]{0}', space=sflag, size = 0x8, scoped, tag = 'scoped memory for tpu_custom_call.1']
    #allocation6 [shape = 'u8[8192]{0}', space=vmem, size = 0x2000, scoped, tag = 'output window, operand 1']
    #allocation7 [shape = 's32[2]{0}', space=sflag, size = 0x8, scoped, tag = 'scoped memory for tpu_custom_call.1']
    %17 = vsyncpa [#allocation5], 0
    %s18 = scalar_lea.sflag [#allocation5], 1
    %19 = vsyncpa %s18, 0
    %20 = vsyncpa [#allocation7], 0
    %s21 = scalar_lea.sflag [#allocation7], 1
    %22 = vsyncpa %s21, 0
    loop: start=0, step=1, limit=10
    $region2: #{tpu_custom_call.1} parent=1 // loop_pre_header
      _
    $region3: #{tpu_custom_call.1} parent=1 // loop_header
      %s24 = sphi 0, %s28
      %p25 = scmp.ge.s32.totalorder %s24, 10
      %s31 = sphi 0, %s43
      %s32 = sphi 0, %s39
      %s33 = sphi 0, %s31
      %s34 = sphi 0, %s32
      %s35 = sphi 0, %s33
      %s36 = sphi 0, %s34
      %s46 = sphi 0, %s48
      %s49 = sphi 0, %s46
      %s50 = sphi 0, %s49
      %s66 = sphi 0, %s50
      %s70 = sphi 0, %s70
      %s72 = sphi 0, %s70
      %s73 = sphi 0, %s72
      %s87 = sphi 0, %s73
      %s91 = sphi 0, %s91
      %s93 = sphi 0, %s91
      %s94 = sphi 0, %s93
      %s108 = sphi 0, %s94
      %s112 = sphi 0, %s112
      %s114 = sphi 0, %s112
      %s115 = sphi 0, %s114
      %s129 = sphi 0, %s115
      %s133 = sphi 0, %s133
      %s135 = sphi 0, %s133
      %s136 = sphi 0, %s135
      %s150 = sphi 0, %s136
      %s154 = sphi 0, %s154
      %s156 = sphi 0, %s154
      %s157 = sphi 0, %s156
      %s171 = sphi 0, %s157
      %s175 = sphi 0, %s175
      %s177 = sphi 0, %s175
      %s178 = sphi 0, %s177
      %s192 = sphi 0, %s178
      %s196 = sphi 0, %s196
      %s198 = sphi 0, %s196
      %s199 = sphi 0, %s198
      %s213 = sphi 0, %s199
      %s217 = sphi 0, %s217
      %s219 = sphi 0, %s217
      %s220 = sphi 0, %s219
      %s234 = sphi 0, %s220
      %s238 = sphi 0, %s238
      %s240 = sphi 0, %s238
      %s241 = sphi 0, %s240
      %s255 = sphi 0, %s241
      %s261 = sphi 0, %s263
      %s264 = sphi 0, %s261
      %s265 = sphi 0, %s264
      %s281 = sphi 0, %s265
      %s289 = sphi 0, %s291
      %s292 = sphi 0, %s289
      %s293 = sphi 0, %s292
      %s309 = sphi 0, %s293
    $region4: #{tpu_custom_call.1} parent=1 // loop_header_branch
      %27 = sbr.rel (%p25) target = $region8
    $region5: #{tpu_custom_call.1} parent=1 // loop_body
      %s29 = ssub.s32 %s24, 1
      %s30 = ssub.s32 %s24, 2
      %s37 = sadd.s32 1, %s32
      %p38 = scmp.ge.s32.totalorder %s37, 4
      %s39 = scalar_select %p38, 0, %s37
      %s40 = sadd.s32 1, %s31
      %s41 = scalar_select %p38, %s40, %s31
      %p42 = scmp.ge.s32.totalorder %s41, 2
      %s43 = scalar_select %p42, 0, %s41
      %s44 = ssub.s32 %s31, %s43
      %p45 = scmp.eq.s32.totalorder %s44, 0
      %s47 = sadd.s32 %s46, 1
      %s48 = scalar_select %p45, %s46, %s47
      %p51 = pneg %p45
      %p52 = scmp.eq.s32.totalorder %s24, 7
      %p53 = por %p51, %p52
      %p54 = scmp.ne.s32.totalorder %s46, %s49
      %p55 = scmp.eq.s32.totalorder %s24, 0
      %p56 = por %p54, %p55
      %p57 = scmp.ne.s32.totalorder %s46, %s49
      %p58 = scmp.eq.s32.totalorder %s29, 7
      %p59 = por %p57, %p58
      %p60 = scmp.ne.s32.totalorder %s49, %s50
      %p61 = scmp.eq.s32.totalorder %s29, 0
      %p62 = por %p60, %p61
      %p63 = scmp.ne.s32.totalorder %s49, %s50
      %p64 = scmp.eq.s32.totalorder %s30, 7
      %p65 = por %p63, %p64
      %p67 = scmp.ne.s32.totalorder %s50, %s66
      %p68 = scmp.eq.s32.totalorder %s30, 0
      %p69 = por %p67, %p68
      %s71 = sadd.s32 %s70, 1
      %p74 = scmp.eq.s32.totalorder %s24, 7
      %p75 = scmp.ne.s32.totalorder %s70, %s72
      %p76 = scmp.eq.s32.totalorder %s24, 0
      %p77 = por %p75, %p76
      %p78 = scmp.ne.s32.totalorder %s70, %s72
      %p79 = scmp.eq.s32.totalorder %s29, 7
      %p80 = por %p78, %p79
      %p81 = scmp.ne.s32.totalorder %s72, %s73
      %p82 = scmp.eq.s32.totalorder %s29, 0
      %p83 = por %p81, %p82
      %p84 = scmp.ne.s32.totalorder %s72, %s73
      %p85 = scmp.eq.s32.totalorder %s30, 7
      %p86 = por %p84, %p85
      %p88 = scmp.ne.s32.totalorder %s73, %s87
      %p89 = scmp.eq.s32.totalorder %s30, 0
      %p90 = por %p88, %p89
      %s92 = sadd.s32 %s91, 1
      %p95 = scmp.eq.s32.totalorder %s24, 7
      %p96 = scmp.ne.s32.totalorder %s91, %s93
      %p97 = scmp.eq.s32.totalorder %s24, 0
      %p98 = por %p96, %p97
      %p99 = scmp.ne.s32.totalorder %s91, %s93
      %p100 = scmp.eq.s32.totalorder %s29, 7
      %p101 = por %p99, %p100
      %p102 = scmp.ne.s32.totalorder %s93, %s94
      %p103 = scmp.eq.s32.totalorder %s29, 0
      %p104 = por %p102, %p103
      %p105 = scmp.ne.s32.totalorder %s93, %s94
      %p106 = scmp.eq.s32.totalorder %s30, 7
      %p107 = por %p105, %p106
      %p109 = scmp.ne.s32.totalorder %s94, %s108
      %p110 = scmp.eq.s32.totalorder %s30, 0
      %p111 = por %p109, %p110
      %s113 = sadd.s32 %s112, 1
      %p116 = scmp.eq.s32.totalorder %s24, 7
      %p117 = scmp.ne.s32.totalorder %s112, %s114
      %p118 = scmp.eq.s32.totalorder %s24, 0
      %p119 = por %p117, %p118
      %p120 = scmp.ne.s32.totalorder %s112, %s114
      %p121 = scmp.eq.s32.totalorder %s29, 7
      %p122 = por %p120, %p121
      %p123 = scmp.ne.s32.totalorder %s114, %s115
      %p124 = scmp.eq.s32.totalorder %s29, 0
      %p125 = por %p123, %p124
      %p126 = scmp.ne.s32.totalorder %s114, %s115
      %p127 = scmp.eq.s32.totalorder %s30, 7
      %p128 = por %p126, %p127
      %p130 = scmp.ne.s32.totalorder %s115, %s129
      %p131 = scmp.eq.s32.totalorder %s30, 0
      %p132 = por %p130, %p131
      %s134 = sadd.s32 %s133, 1
      %p137 = scmp.eq.s32.totalorder %s24, 7
      %p138 = scmp.ne.s32.totalorder %s133, %s135
      %p139 = scmp.eq.s32.totalorder %s24, 0
      %p140 = por %p138, %p139
      %p141 = scmp.ne.s32.totalorder %s133, %s135
      %p142 = scmp.eq.s32.totalorder %s29, 7
      %p143 = por %p141, %p142
      %p144 = scmp.ne.s32.totalorder %s135, %s136
      %p145 = scmp.eq.s32.totalorder %s29, 0
      %p146 = por %p144, %p145
      %p147 = scmp.ne.s32.totalorder %s135, %s136
      %p148 = scmp.eq.s32.totalorder %s30, 7
      %p149 = por %p147, %p148
      %p151 = scmp.ne.s32.totalorder %s136, %s150
      %p152 = scmp.eq.s32.totalorder %s30, 0
      %p153 = por %p151, %p152
      %s155 = sadd.s32 %s154, 1
      %p158 = scmp.eq.s32.totalorder %s24, 7
      %p159 = scmp.ne.s32.totalorder %s154, %s156
      %p160 = scmp.eq.s32.totalorder %s24, 0
      %p161 = por %p159, %p160
      %p162 = scmp.ne.s32.totalorder %s154, %s156
      %p163 = scmp.eq.s32.totalorder %s29, 7
      %p164 = por %p162, %p163
      %p165 = scmp.ne.s32.totalorder %s156, %s157
      %p166 = scmp.eq.s32.totalorder %s29, 0
      %p167 = por %p165, %p166
      %p168 = scmp.ne.s32.totalorder %s156, %s157
      %p169 = scmp.eq.s32.totalorder %s30, 7
      %p170 = por %p168, %p169
      %p172 = scmp.ne.s32.totalorder %s157, %s171
      %p173 = scmp.eq.s32.totalorder %s30, 0
      %p174 = por %p172, %p173
      %s176 = sadd.s32 %s175, 1
      %p179 = scmp.eq.s32.totalorder %s24, 7
      %p180 = scmp.ne.s32.totalorder %s175, %s177
      %p181 = scmp.eq.s32.totalorder %s24, 0
      %p182 = por %p180, %p181
      %p183 = scmp.ne.s32.totalorder %s175, %s177
      %p184 = scmp.eq.s32.totalorder %s29, 7
      %p185 = por %p183, %p184
      %p186 = scmp.ne.s32.totalorder %s177, %s178
      %p187 = scmp.eq.s32.totalorder %s29, 0
      %p188 = por %p186, %p187
      %p189 = scmp.ne.s32.totalorder %s177, %s178
      %p190 = scmp.eq.s32.totalorder %s30, 7
      %p191 = por %p189, %p190
      %p193 = scmp.ne.s32.totalorder %s178, %s192
      %p194 = scmp.eq.s32.totalorder %s30, 0
      %p195 = por %p193, %p194
      %s197 = sadd.s32 %s196, 1
      %p200 = scmp.eq.s32.totalorder %s24, 7
      %p201 = scmp.ne.s32.totalorder %s196, %s198
      %p202 = scmp.eq.s32.totalorder %s24, 0
      %p203 = por %p201, %p202
      %p204 = scmp.ne.s32.totalorder %s196, %s198
      %p205 = scmp.eq.s32.totalorder %s29, 7
      %p206 = por %p204, %p205
      %p207 = scmp.ne.s32.totalorder %s198, %s199
      %p208 = scmp.eq.s32.totalorder %s29, 0
      %p209 = por %p207, %p208
      %p210 = scmp.ne.s32.totalorder %s198, %s199
      %p211 = scmp.eq.s32.totalorder %s30, 7
      %p212 = por %p210, %p211
      %p214 = scmp.ne.s32.totalorder %s199, %s213
      %p215 = scmp.eq.s32.totalorder %s30, 0
      %p216 = por %p214, %p215
      %s218 = sadd.s32 %s217, 1
      %p221 = scmp.eq.s32.totalorder %s24, 7
      %p222 = scmp.ne.s32.totalorder %s217, %s219
      %p223 = scmp.eq.s32.totalorder %s24, 0
      %p224 = por %p222, %p223
      %p225 = scmp.ne.s32.totalorder %s217, %s219
      %p226 = scmp.eq.s32.totalorder %s29, 7
      %p227 = por %p225, %p226
      %p228 = scmp.ne.s32.totalorder %s219, %s220
      %p229 = scmp.eq.s32.totalorder %s29, 0
      %p230 = por %p228, %p229
      %p231 = scmp.ne.s32.totalorder %s219, %s220
      %p232 = scmp.eq.s32.totalorder %s30, 7
      %p233 = por %p231, %p232
      %p235 = scmp.ne.s32.totalorder %s220, %s234
      %p236 = scmp.eq.s32.totalorder %s30, 0
      %p237 = por %p235, %p236
      %s239 = sadd.s32 %s238, 1
      %p242 = scmp.eq.s32.totalorder %s24, 7
      %p243 = scmp.ne.s32.totalorder %s238, %s240
      %p244 = scmp.eq.s32.totalorder %s24, 0
      %p245 = por %p243, %p244
      %p246 = scmp.ne.s32.totalorder %s238, %s240
      %p247 = scmp.eq.s32.totalorder %s29, 7
      %p248 = por %p246, %p247
      %p249 = scmp.ne.s32.totalorder %s240, %s241
      %p250 = scmp.eq.s32.totalorder %s29, 0
      %p251 = por %p249, %p250
      %p252 = scmp.ne.s32.totalorder %s240, %s241
      %p253 = scmp.eq.s32.totalorder %s30, 7
      %p254 = por %p252, %p253
      %p256 = scmp.ne.s32.totalorder %s241, %s255
      %p257 = scmp.eq.s32.totalorder %s30, 0
      %p258 = por %p256, %p257
      %s259 = ssub.s32 %s31, %s43
      %p260 = scmp.eq.s32.totalorder %s259, 0
      %s262 = sadd.s32 %s261, 1
      %s263 = scalar_select %p260, %s261, %s262
      %p266 = pneg %p260
      %p267 = scmp.eq.s32.totalorder %s24, 7
      %p268 = por %p266, %p267
      %p269 = scmp.ne.s32.totalorder %s261, %s264
      %p270 = scmp.eq.s32.totalorder %s24, 0
      %p271 = por %p269, %p270
      %p272 = scmp.ne.s32.totalorder %s261, %s264
      %p273 = scmp.eq.s32.totalorder %s29, 7
      %p274 = por %p272, %p273
      %p275 = scmp.ne.s32.totalorder %s264, %s265
      %p276 = scmp.eq.s32.totalorder %s29, 0
      %p277 = por %p275, %p276
      %p278 = scmp.ne.s32.totalorder %s264, %s265
      %p279 = scmp.eq.s32.totalorder %s30, 7
      %p280 = por %p278, %p279
      %p282 = scmp.ne.s32.totalorder %s265, %s281
      %p283 = scmp.eq.s32.totalorder %s30, 0
      %p284 = por %p282, %p283
      %s285 = ssub.s32 %s31, %s43
      %s286 = ssub.s32 %s32, %s39
      %s287 = sor.u32 %s285, %s286
      %p288 = scmp.eq.s32.totalorder %s287, 0
      %s290 = sadd.s32 %s289, 1
      %s291 = scalar_select %p288, %s289, %s290
      %p294 = pneg %p288
      %p295 = scmp.eq.s32.totalorder %s24, 7
      %p296 = por %p294, %p295
      %p297 = scmp.ne.s32.totalorder %s289, %s292
      %p298 = scmp.eq.s32.totalorder %s24, 0
      %p299 = por %p297, %p298
      %p300 = scmp.ne.s32.totalorder %s289, %s292
      %p301 = scmp.eq.s32.totalorder %s29, 7
      %p302 = por %p300, %p301
      %p303 = scmp.ne.s32.totalorder %s292, %s293
      %p304 = scmp.eq.s32.totalorder %s29, 0
      %p305 = por %p303, %p304
      %p306 = scmp.ne.s32.totalorder %s292, %s293
      %p307 = scmp.eq.s32.totalorder %s30, 7
      %p308 = por %p306, %p307
      %p310 = scmp.ne.s32.totalorder %s293, %s309
      %p311 = scmp.eq.s32.totalorder %s30, 0
      %p312 = por %p310, %p311
      %p313 = scmp.le.s32.totalorder 1, %s24
      %p314 = scmp.lt.s32.totalorder %s24, 9
      %p315 = pnand %p313, %p314
      %p316 = pneg %p315
      // Predicated region
      $region9: #{tpu_custom_call.1} parent=5 // pred_check
        _
      $region10: #{tpu_custom_call.1} parent=5 // pred_check_branch
        %318 = sbr.rel (%p315) target = $region12
      $region11: #{tpu_custom_call.1} parent=5 // pred_region
        %s319 = ssub.s32 %s24, 1
        // Predicated region
        $region13: #{tpu_custom_call.1} parent=11 // pred_check
          %p320 = pneg %p83
        $region14: #{tpu_custom_call.1} parent=11 // pred_check_branch
          %322 = sbr.rel (%p320) target = $region16
        $region15: #{tpu_custom_call.1} parent=11 // pred_region
          _
        $region16: #{tpu_custom_call.1} parent=11 // pred_fallthru
          _
        // Predicated region
        $region17: #{tpu_custom_call.1} parent=11 // pred_check
          %p323 = pneg %p104
        $region18: #{tpu_custom_call.1} parent=11 // pred_check_branch
          %325 = sbr.rel (%p323) target = $region20
        $region19: #{tpu_custom_call.1} parent=11 // pred_region
          _
        $region20: #{tpu_custom_call.1} parent=11 // pred_fallthru
          _
        // Predicated region
        $region21: #{tpu_custom_call.1} parent=11 // pred_check
          %p326 = pneg %p125
        $region22: #{tpu_custom_call.1} parent=11 // pred_check_branch
          %328 = sbr.rel (%p326) target = $region24
        $region23: #{tpu_custom_call.1} parent=11 // pred_region
          _
        $region24: #{tpu_custom_call.1} parent=11 // pred_fallthru
          _
        // Predicated region
        $region25: #{tpu_custom_call.1} parent=11 // pred_check
          %p329 = pneg %p146
        $region26: #{tpu_custom_call.1} parent=11 // pred_check_branch
          %331 = sbr.rel (%p329) target = $region28
        $region27: #{tpu_custom_call.1} parent=11 // pred_region
          _
        $region28: #{tpu_custom_call.1} parent=11 // pred_fallthru
          _
        // Predicated region
        $region29: #{tpu_custom_call.1} parent=11 // pred_check
          %p332 = pneg %p167
        $region30: #{tpu_custom_call.1} parent=11 // pred_check_branch
          %334 = sbr.rel (%p332) target = $region32
        $region31: #{tpu_custom_call.1} parent=11 // pred_region
          _
        $region32: #{tpu_custom_call.1} parent=11 // pred_fallthru
          _
        // Predicated region
        $region33: #{tpu_custom_call.1} parent=11 // pred_check
          %p335 = pneg %p188
        $region34: #{tpu_custom_call.1} parent=11 // pred_check_branch
          %337 = sbr.rel (%p335) target = $region36
        $region35: #{tpu_custom_call.1} parent=11 // pred_region
          _
        $region36: #{tpu_custom_call.1} parent=11 // pred_fallthru
          _
        // Predicated region
        $region37: #{tpu_custom_call.1} parent=11 // pred_check
          %p338 = pneg %p209
        $region38: #{tpu_custom_call.1} parent=11 // pred_check_branch
          %340 = sbr.rel (%p338) target = $region40
        $region39: #{tpu_custom_call.1} parent=11 // pred_region
          _
        $region40: #{tpu_custom_call.1} parent=11 // pred_fallthru
          _
        // Predicated region
        $region41: #{tpu_custom_call.1} parent=11 // pred_check
          %p341 = pneg %p230
        $region42: #{tpu_custom_call.1} parent=11 // pred_check_branch
          %343 = sbr.rel (%p341) target = $region44
        $region43: #{tpu_custom_call.1} parent=11 // pred_region
          _
        $region44: #{tpu_custom_call.1} parent=11 // pred_fallthru
          _
        // Predicated region
        $region45: #{tpu_custom_call.1} parent=11 // pred_check
          %p344 = pneg %p251
        $region46: #{tpu_custom_call.1} parent=11 // pred_check_branch
          %346 = sbr.rel (%p344) target = $region48
        $region47: #{tpu_custom_call.1} parent=11 // pred_region
          _
        $region48: #{tpu_custom_call.1} parent=11 // pred_fallthru
          _
      $region12: #{tpu_custom_call.1} parent=5 // pred_fallthru
        _
      %p347 = scmp.lt.s32.totalorder %s24, 8
      // Predicated region
      $region49: #{tpu_custom_call.1} parent=5 // pred_check
        %p348 = pneg %p347
      $region50: #{tpu_custom_call.1} parent=5 // pred_check_branch
        %350 = sbr.rel (%p348) target = $region52
      $region51: #{tpu_custom_call.1} parent=5 // pred_region
        // Predicated region
        $region53: #{tpu_custom_call.1} parent=51 // pred_check
          %p351 = pneg %p56
        $region54: #{tpu_custom_call.1} parent=51 // pred_check_branch
          %353 = sbr.rel (%p351) target = $region56
        $region55: #{tpu_custom_call.1} parent=51 // pred_region
          %p354 = scmp.lt.s32.totalorder %s31, 1
          %s355 = scalar_select %p354, %s31, 1
          %s356 = smul.addr %s355, 8
          %s357 = scalar_lea.vmem %s0, %s356
        $region56: #{tpu_custom_call.1} parent=51 // pred_fallthru
          _
      $region52: #{tpu_custom_call.1} parent=5 // pred_fallthru
        _
      %p358 = scmp.le.s32.totalorder 1, %s24
      %p359 = scmp.lt.s32.totalorder %s24, 9
      %p360 = pnand %p358, %p359
      %p361 = pneg %p360
      // Predicated region
      $region57: #{tpu_custom_call.1} parent=5 // pred_check
        _
      $region58: #{tpu_custom_call.1} parent=5 // pred_check_branch
        %363 = sbr.rel (%p360) target = $region60
      $region59: #{tpu_custom_call.1} parent=5 // pred_region
        %s364 = ssub.s32 %s24, 1
        %p365 = scmp.lt.s32.totalorder %s33, 1
        %s366 = scalar_select %p365, %s33, 1
        %s367 = smul.addr %s366, 8
        %s368 = scalar_lea.vmem %s0, %s367
        %p369 = pneg %p62
        %p370 = pneg %p59
        %p371 = pneg %p83
        %p372 = pneg %p80
        %p373 = pneg %p104
        %p374 = pneg %p101
        %p375 = pneg %p125
        %p376 = pneg %p122
        %p377 = pneg %p146
        %p378 = pneg %p143
        %p379 = pneg %p167
        %p380 = pneg %p164
        %p381 = pneg %p188
        %p382 = pneg %p185
        %p383 = pneg %p209
        %p384 = pneg %p206
        %p385 = pneg %p230
        %p386 = pneg %p227
        %p387 = pneg %p251
        %p388 = pneg %p248
        %p389 = pneg %p277
        %p390 = pneg %p274
        %s391 = sand.u32 %s264, 1
        %s392 = scalar_lea.sflag [#allocation5], %s391
        %s393 = sand.u32 %s264, 1
        %s394 = smul.addr %s393, 8
        %s395 = scalar_lea.vmem [#allocation4], %s394
        %p396 = pneg %p305
        %p397 = pneg %p302
        %s398 = sand.u32 %s292, 1
        %s399 = scalar_lea.sflag [#allocation7], %s398
        %s400 = sand.u32 %s292, 1
        %s401 = smul.addr %s400, 8
        %s402 = scalar_lea.vmem [#allocation6], %s401
        %p403 = scmp.lt.s32.totalorder %s33, 1
        %s404 = scalar_select %p403, %s33, 1
        %s405 = smul.addr %s404, 8
        %s406 = scalar_lea.vmem %s0, %s405
        %p408 = scmp.eq.s32.totalorder %s34, 0
        // Predicated region
        $region61: #{tpu_custom_call.1} parent=59 // pred_check
          %p409 = pneg %p408
        $region62: #{tpu_custom_call.1} parent=59 // pred_check_branch
          %411 = sbr.rel (%p409) target = $region64
        $region63: #{tpu_custom_call.1} parent=59 // pred_region
          %v412 = vld [vmem:[%s406] sm:$0xff]
          %v413 = vld [vmem:[%s1] sm:$0x1]
          %v414 = vld [vmem:[%s2] sm:$0x1]
          %vm415 = vcmask 261120
          %v416 = vsel %vm415, %v412, 0.0
          %417 = vadd.xlane.f32.xlu0 %v416
          %v418 = vpop.xlane.xlu0 %417
          %v419 = vrcp.pop 32.0
          %v420 = vmul.f32 %v418, %v419
          %v421 = vsub.f32 %v412, %v420
          %v422 = vmul.f32 %v421, %v421
          %v423 = vsel %vm415, %v422, 0.0
          %424 = vadd.xlane.f32.xlu0 %v423
          %v425 = vpop.xlane.xlu0 %424
          %v426 = vmul.f32 %v425, %v419
          %v427 = vadd.f32 %v426, 1e-05
          %v428 = vrsqrt.pop %v427
          %v429 = vmul.f32 %v421, %v428
          %v431 = vlaneseq
          %v432 = vshrl.u32 %v431, 7
          %v433 = vsub.s32 0, %v432
          %v434 = vrot.slane %v413, %v433
          %v436 = vmul.f32 %v429, %v434
          %v438 = vlaneseq
          %v439 = vshrl.u32 %v438, 7
          %v440 = vsub.s32 0, %v439
          %v441 = vrot.slane %v414, %v440
          %v443 = vadd.f32 %v436, %v441
          %v444 = vld [vmem:[%s3] sm:$0xf]
          %v445 = vld [vmem:[%s3 + $0x4] sm:$0xf]
          %v446 = vld [vmem:[%s3 + $0x8] sm:$0xf]
          %v447 = vld [vmem:[%s3 + $0xc] sm:$0xf]
          %v448 = vld [vmem:[%s3 + $0x10] sm:$0xf]
          %v449 = vld [vmem:[%s3 + $0x14] sm:$0xf]
          %v450 = vld [vmem:[%s3 + $0x18] sm:$0xf]
          %v451 = vld [vmem:[%s3 + $0x1c] sm:$0xf]
          %v452 = vld [vmem:[%s3 + $0x20] sm:$0xf]
          %v453 = vld [vmem:[%s3 + $0x24] sm:$0xf]
          %v454 = vld [vmem:[%s3 + $0x28] sm:$0xf]
          %v455 = vld [vmem:[%s3 + $0x2c] sm:$0xf]
          %v456 = vld [vmem:[%s3 + $0x30] sm:$0xf]
          %v457 = vld [vmem:[%s3 + $0x34] sm:$0xf]
          %v458 = vld [vmem:[%s3 + $0x38] sm:$0xf]
          %v459 = vld [vmem:[%s3 + $0x3c] sm:$0xf]
          %v460 = vld [vmem:[%s3 + $0x40] sm:$0xf]
          %v461 = vld [vmem:[%s3 + $0x44] sm:$0xf]
          %v462 = vld [vmem:[%s3 + $0x48] sm:$0xf]
          %v463 = vld [vmem:[%s3 + $0x4c] sm:$0xf]
          %v464 = vld [vmem:[%s3 + $0x50] sm:$0xf]
          %v465 = vld [vmem:[%s3 + $0x54] sm:$0xf]
          %v466 = vld [vmem:[%s3 + $0x58] sm:$0xf]
          %v467 = vld [vmem:[%s3 + $0x5c] sm:$0xf]
          %v468 = vpack.c.bf16 %v443, %v443
          %v493 = vunpack.c.l.b16 %v444
          %v494 = vunpack.c.l.b16 %v445
          %v495 = vunpack.c.l.b16 %v446
          %v496 = vunpack.c.l.b16 %v447
          %v497 = vunpack.c.l.b16 %v448
          %v498 = vunpack.c.l.b16 %v449
          %v499 = vunpack.c.l.b16 %v450
          %v500 = vunpack.c.l.b16 %v451
          %v501 = vunpack.c.l.b16 %v452
          %v502 = vunpack.c.l.b16 %v453
          %v503 = vunpack.c.l.b16 %v454
          %v504 = vunpack.c.l.b16 %v455
          %v505 = vunpack.c.l.b16 %v456
          %v506 = vunpack.c.l.b16 %v457
          %v507 = vunpack.c.l.b16 %v458
          %v508 = vunpack.c.l.b16 %v459
          %v509 = vunpack.c.l.b16 %v460
          %v510 = vunpack.c.l.b16 %v461
          %v511 = vunpack.c.l.b16 %v462
          %v512 = vunpack.c.l.b16 %v463
          %v513 = vunpack.c.l.b16 %v464
          %v514 = vunpack.c.l.b16 %v465
          %v515 = vunpack.c.l.b16 %v466
          %v516 = vunpack.c.l.b16 %v467
          %v517 = vpack.c.b16 %v494, %v493
          %v518 = vpack.c.b16 %v496, %v495
          %v519 = vpack.c.b16 %v498, %v497
          %v520 = vpack.c.b16 %v500, %v499
          %v521 = vpack.c.b16 %v502, %v501
          %v522 = vpack.c.b16 %v504, %v503
          %v523 = vpack.c.b16 %v506, %v505
          %v524 = vpack.c.b16 %v508, %v507
          %v525 = vpack.c.b16 %v510, %v509
          %v526 = vpack.c.b16 %v512, %v511
          %v527 = vpack.c.b16 %v514, %v513
          %v528 = vpack.c.b16 %v516, %v515
          %v530 = vsel %vm415, %v517, 0
          %v533 = vsel %vm415, %v518, 0
          %v536 = vsel %vm415, %v519, 0
          %v539 = vsel %vm415, %v520, 0
          %v542 = vsel %vm415, %v521, 0
          %v545 = vsel %vm415, %v522, 0
          %v548 = vsel %vm415, %v523, 0
          %v551 = vsel %vm415, %v524, 0
          %v554 = vsel %vm415, %v525, 0
          %v557 = vsel %vm415, %v526, 0
          %v560 = vsel %vm415, %v527, 0
          %v563 = vsel %vm415, %v528, 0
          %v566 = vsel %vm415, %v468, 0
          %568 = vmatprep.subr.bf16.mxu0 0
          %569 = vmatpush1.bf16.xpose.msra.mxu0 %v566
          %570 = vmatprep.subr.bf16.mxu0 0
          %571 = vmatpush1.bf16.xpose.msra.mxu0 0
          %572 = vmatprep.subr.bf16.mxu0 0
          %573 = vmatpush1.bf16.xpose.msra.mxu0 0
          %574 = vmatprep.subr.bf16.mxu0 0
          %575 = vmatpush1.bf16.xpose.msra.mxu0 0
          %576 = vmatprep.subr.bf16.mxu0 0
          %577 = vmatpush1.bf16.xpose.msra.mxu0 0
          %578 = vmatprep.subr.bf16.mxu0 0
          %579 = vmatpush1.bf16.xpose.msra.mxu0 0
          %580 = vmatprep.subr.bf16.mxu0 0
          %581 = vmatpush1.bf16.xpose.msra.mxu0 0
          %582 = vmatprep.subr.bf16.mxu0 0
          %583 = vmatpush1.bf16.xpose.msra.mxu0 0
          %584 = vmatprep.subr.bf16.mxu0 0
          %585 = vmatpush1.bf16.xpose.msra.mxu0 0
          %586 = vmatprep.subr.bf16.mxu0 0
          %587 = vmatpush1.bf16.xpose.msra.mxu0 0
          %588 = vmatprep.subr.bf16.mxu0 0
          %589 = vmatpush1.bf16.xpose.msra.mxu0 0
          %590 = vmatprep.subr.bf16.mxu0 0
          %591 = vmatpush1.bf16.xpose.msra.mxu0 0
          %592 = vmatprep.subr.bf16.mxu0 0
          %593 = vmatpush1.bf16.xpose.msra.mxu0 0
          %594 = vmatprep.subr.bf16.mxu0 0
          %595 = vmatpush1.bf16.xpose.msra.mxu0 0
          %596 = vmatprep.subr.bf16.mxu0 0
          %597 = vmatpush1.bf16.xpose.msra.mxu0 0
          %598 = vmatprep.subr.bf16.mxu0 0
          %599 = vmatpush1.bf16.xpose.msra.mxu0 0
          %600 = vmatprep.mubr.bf16.mxu0 0
          %601 = vmatmul.mubr.bf16.gmra.mrb[0].mxu0 %v530
          %v602 = vpop.f32.mrb[0].mxu0
          %v603 = vadd.f32 0.0, %v602
          %v604 = vpop.f32.mrb[0].mxu0
          %v605 = vpop.f32.mrb[0].mxu0
          %v606 = vadd.f32 0.0, %v605
          %v607 = vpop.f32.mrb[0].mxu0
          %608 = vmatprep.mubr.bf16.mxu0 0
          %609 = vmatmul.mubr.bf16.gmra.mrb[0].mxu0 %v533
          %v610 = vpop.f32.mrb[0].mxu0
          %v611 = vadd.f32 0.0, %v610
          %v612 = vpop.f32.mrb[0].mxu0
          %v613 = vpop.f32.mrb[0].mxu0
          %v614 = vadd.f32 0.0, %v613
          %v615 = vpop.f32.mrb[0].mxu0
          %616 = vmatprep.mubr.bf16.mxu0 0
          %617 = vmatmul.mubr.bf16.gmra.mrb[0].mxu0 %v536
          %v618 = vpop.f32.mrb[0].mxu0
          %v619 = vadd.f32 0.0, %v618
          %v620 = vpop.f32.mrb[0].mxu0
          %v621 = vpop.f32.mrb[0].mxu0
          %v622 = vadd.f32 0.0, %v621
          %v623 = vpop.f32.mrb[0].mxu0
          %624 = vmatprep.mubr.bf16.mxu0 0
          %625 = vmatmul.mubr.bf16.gmra.mrb[0].mxu0 %v539
          %v626 = vpop.f32.mrb[0].mxu0
          %v627 = vadd.f32 0.0, %v626
          %v628 = vpop.f32.mrb[0].mxu0
          %v629 = vpop.f32.mrb[0].mxu0
          %v630 = vadd.f32 0.0, %v629
          %v631 = vpop.f32.mrb[0].mxu0
          %632 = vmatprep.mubr.bf16.mxu0 0
          %633 = vmatmul.mubr.bf16.gmra.mrb[0].mxu0 %v542
          %v634 = vpop.f32.mrb[0].mxu0
          %v635 = vadd.f32 0.0, %v634
          %v636 = vpop.f32.mrb[0].mxu0
          %v637 = vpop.f32.mrb[0].mxu0
          %v638 = vadd.f32 0.0, %v637
          %v639 = vpop.f32.mrb[0].mxu0
          %640 = vmatprep.mubr.bf16.mxu0 0
          %641 = vmatmul.mubr.bf16.gmra.mrb[0].mxu0 %v545
          %v642 = vpop.f32.mrb[0].mxu0
          %v643 = vadd.f32 0.0, %v642
          %v644 = vpop.f32.mrb[0].mxu0
          %v645 = vpop.f32.mrb[0].mxu0
          %v646 = vadd.f32 0.0, %v645
          %v647 = vpop.f32.mrb[0].mxu0
          %648 = vmatprep.mubr.bf16.mxu0 0
          %649 = vmatmul.mubr.bf16.gmra.mrb[0].mxu0 %v548
          %v650 = vpop.f32.mrb[0].mxu0
          %v651 = vadd.f32 0.0, %v650
          %v652 = vpop.f32.mrb[0].mxu0
          %v653 = vpop.f32.mrb[0].mxu0
          %v654 = vadd.f32 0.0, %v653
          %v655 = vpop.f32.mrb[0].mxu0
          %656 = vmatprep.mubr.bf16.mxu0 0
          %657 = vmatmul.mubr.bf16.gmra.mrb[0].mxu0 %v551
          %v658 = vpop.f32.mrb[0].mxu0
          %v659 = vadd.f32 0.0, %v658
          %v660 = vpop.f32.mrb[0].mxu0
          %v661 = vpop.f32.mrb[0].mxu0
          %v662 = vadd.f32 0.0, %v661
          %v663 = vpop.f32.mrb[0].mxu0
          %664 = vmatprep.mubr.bf16.mxu0 0
          %665 = vmatmul.mubr.bf16.gmra.mrb[0].mxu0 %v554
          %v666 = vpop.f32.mrb[0].mxu0
          %v667 = vadd.f32 0.0, %v666
          %v668 = vpop.f32.mrb[0].mxu0
          %v669 = vpop.f32.mrb[0].mxu0
          %v670 = vadd.f32 0.0, %v669
          %v671 = vpop.f32.mrb[0].mxu0
          %672 = vmatprep.mubr.bf16.mxu0 0
          %673 = vmatmul.mubr.bf16.gmra.mrb[0].mxu0 %v557
          %v674 = vpop.f32.mrb[0].mxu0
          %v675 = vadd.f32 0.0, %v674
          %v676 = vpop.f32.mrb[0].mxu0
          %v677 = vpop.f32.mrb[0].mxu0
          %v678 = vadd.f32 0.0, %v677
          %v679 = vpop.f32.mrb[0].mxu0
          %680 = vmatprep.mubr.bf16.mxu0 0
          %681 = vmatmul.mubr.bf16.gmra.mrb[0].mxu0 %v560
          %v682 = vpop.f32.mrb[0].mxu0
          %v683 = vadd.f32 0.0, %v682
          %v684 = vpop.f32.mrb[0].mxu0
          %v685 = vpop.f32.mrb[0].mxu0
          %v686 = vadd.f32 0.0, %v685
          %v687 = vpop.f32.mrb[0].mxu0
          %688 = vmatprep.mubr.bf16.mxu0 0
          %689 = vmatmul.mubr.bf16.gmra.mrb[0].mxu0 %v563
          %v690 = vpop.f32.mrb[0].mxu0
          %v691 = vadd.f32 0.0, %v690
          %v692 = vpop.f32.mrb[0].mxu0
          %v693 = vpop.f32.mrb[0].mxu0
          %v694 = vadd.f32 0.0, %v693
          %v695 = vpop.f32.mrb[0].mxu0
          %696 = vdwg.mxu0
          %vm697 = vcmask 64512
          %698 = vst.msk [vmem:[#allocation2] sm:$0xff] %vm697, %v603
          %699 = vst.msk [vmem:[#allocation2 + $0x8] sm:$0xff] %vm697, %v606
          %700 = vst.msk [vmem:[#allocation2 + $0x10] sm:$0xff] %vm697, %v611
          %701 = vst.msk [vmem:[#allocation2 + $0x18] sm:$0xff] %vm697, %v614
          %702 = vst.msk [vmem:[#allocation2 + $0x20] sm:$0xff] %vm697, %v619
          %703 = vst.msk [vmem:[#allocation2 + $0x28] sm:$0xff] %vm697, %v622
          %704 = vst.msk [vmem:[#allocation2 + $0x30] sm:$0xff] %vm697, %v627
          %705 = vst.msk [vmem:[#allocation2 + $0x38] sm:$0xff] %vm697, %v630
          %706 = vst.msk [vmem:[#allocation2 + $0x40] sm:$0xff] %vm697, %v635
          %707 = vst.msk [vmem:[#allocation2 + $0x48] sm:$0xff] %vm697, %v638
          %708 = vst.msk [vmem:[#allocation2 + $0x50] sm:$0xff] %vm697, %v643
          %709 = vst.msk [vmem:[#allocation2 + $0x58] sm:$0xff] %vm697, %v646
          %710 = vst.msk [vmem:[#allocation2 + $0x60] sm:$0xff] %vm697, %v651
          %711 = vst.msk [vmem:[#allocation2 + $0x68] sm:$0xff] %vm697, %v654
          %712 = vst.msk [vmem:[#allocation2 + $0x70] sm:$0xff] %vm697, %v659
          %713 = vst.msk [vmem:[#allocation2 + $0x78] sm:$0xff] %vm697, %v662
          %714 = vst.msk [vmem:[#allocation2 + $0x80] sm:$0xff] %vm697, %v667
          %715 = vst.msk [vmem:[#allocation2 + $0x88] sm:$0xff] %vm697, %v670
          %716 = vst.msk [vmem:[#allocation2 + $0x90] sm:$0xff] %vm697, %v675
          %717 = vst.msk [vmem:[#allocation2 + $0x98] sm:$0xff] %vm697, %v678
          %718 = vst.msk [vmem:[#allocation2 + $0xa0] sm:$0xff] %vm697, %v683
          %719 = vst.msk [vmem:[#allocation2 + $0xa8] sm:$0xff] %vm697, %v686
          %720 = vst.msk [vmem:[#allocation2 + $0xb0] sm:$0xff] %vm697, %v691
          %721 = vst.msk [vmem:[#allocation2 + $0xb8] sm:$0xff] %vm697, %v694
        $region64: #{tpu_custom_call.1} parent=59 // pred_fallthru
          _
        %s722 = smul.u32 %s34, 16
        %s723 = scalar_lea.vmem [#allocation2], %s722
        %v724 = vld [vmem:[%s723] sm:$0xff]
        %v725 = vld [vmem:[%s723 + $0x8] sm:$0xff]
        %s726 = sadd.s32 %s722, 64
        %s727 = scalar_lea.vmem [#allocation2], %s726
        %v728 = vld [vmem:[%s727] sm:$0xff]
        %v729 = vld [vmem:[%s727 + $0x8] sm:$0xff]
        %v730 = vld [vmem:[%s4] sm:$0xff]
        %v731 = vld [vmem:[%s4 + $0x8] sm:$0xff]
        %v732 = vld [vmem:[%s5] sm:$0xff]
        %v733 = vld [vmem:[%s5 + $0x8] sm:$0xff]
        %vm734 = vcmask 64512
        %v735 = vsel %vm734, %v728, 0.0
        %v736 = vsel %vm734, %v729, 0.0
        %v737 = vadd.f32 %v735, %v736
        %v738 = vrot.slane %v737, 4
        %v739 = vadd.f32 %v737, %v738
        %v740 = vrot.slane %v739, 2
        %v741 = vadd.f32 %v739, %v740
        %v742 = vrot.slane %v741, 1
        %v743 = vadd.f32 %v741, %v742
        %v744 = vrcp.pop 16.0
        %v745 = vmul.f32 %v743, %v744
        %v746 = vsub.f32 %v728, %v745
        %v747 = vsub.f32 %v729, %v745
        %v748 = vmul.f32 %v746, %v746
        %v749 = vmul.f32 %v747, %v747
        %v750 = vsel %vm734, %v748, 0.0
        %v751 = vsel %vm734, %v749, 0.0
        %v752 = vadd.f32 %v750, %v751
        %v753 = vrot.slane %v752, 4
        %v754 = vadd.f32 %v752, %v753
        %v755 = vrot.slane %v754, 2
        %v756 = vadd.f32 %v754, %v755
        %v757 = vrot.slane %v756, 1
        %v758 = vadd.f32 %v756, %v757
        %v759 = vmul.f32 %v758, %v744
        %v760 = vadd.f32 %v759, 1e-05
        %v761 = vrsqrt.pop %v760
        %v762 = vmul.f32 %v746, %v761
        %v763 = vmul.f32 %v747, %v761
        %765 = vset.pattern.permute.xlu0 0
        %766 = vperm.xlu0 %765, %v730
        %v767 = vpop.permute.xlu0 %766
        %770 = vset.pattern.permute.xlu0 0
        %771 = vperm.xlu0 %770, %v731
        %v772 = vpop.permute.xlu0 %771
        %v774 = vmul.f32 %v762, %v767
        %v775 = vmul.f32 %v763, %v772
        %777 = vset.pattern.permute.xlu0 0
        %778 = vperm.xlu0 %777, %v732
        %v779 = vpop.permute.xlu0 %778
        %782 = vset.pattern.permute.xlu0 0
        %783 = vperm.xlu0 %782, %v733
        %v784 = vpop.permute.xlu0 %783
        %v786 = vadd.f32 %v774, %v779
        %v787 = vadd.f32 %v775, %v784
        %s788 = sadd.s32 %s722, 128
        %s789 = scalar_lea.vmem [#allocation2], %s788
        %v790 = vld [vmem:[%s789] sm:$0xff]
        %v791 = vld [vmem:[%s789 + $0x8] sm:$0xff]
        %v792 = vld [vmem:[%s6] sm:$0xff]
        %v793 = vld [vmem:[%s6 + $0x8] sm:$0xff]
        %v794 = vld [vmem:[%s7] sm:$0xff]
        %v795 = vld [vmem:[%s7 + $0x8] sm:$0xff]
        %v796 = vsel %vm734, %v790, 0.0
        %v797 = vsel %vm734, %v791, 0.0
        %v798 = vadd.f32 %v796, %v797
        %v799 = vrot.slane %v798, 4
        %v800 = vadd.f32 %v798, %v799
        %v801 = vrot.slane %v800, 2
        %v802 = vadd.f32 %v800, %v801
        %v803 = vrot.slane %v802, 1
        %v804 = vadd.f32 %v802, %v803
        %v805 = vmul.f32 %v804, %v744
        %v806 = vsub.f32 %v790, %v805
        %v807 = vsub.f32 %v791, %v805
        %v808 = vmul.f32 %v806, %v806
        %v809 = vmul.f32 %v807, %v807
        %v810 = vsel %vm734, %v808, 0.0
        %v811 = vsel %vm734, %v809, 0.0
        %v812 = vadd.f32 %v810, %v811
        %v813 = vrot.slane %v812, 4
        %v814 = vadd.f32 %v812, %v813
        %v815 = vrot.slane %v814, 2
        %v816 = vadd.f32 %v814, %v815
        %v817 = vrot.slane %v816, 1
        %v818 = vadd.f32 %v816, %v817
        %v819 = vmul.f32 %v818, %v744
        %v820 = vadd.f32 %v819, 1e-05
        %v821 = vrsqrt.pop %v820
        %v822 = vmul.f32 %v806, %v821
        %v823 = vmul.f32 %v807, %v821
        %825 = vset.pattern.permute.xlu0 0
        %826 = vperm.xlu0 %825, %v792
        %v827 = vpop.permute.xlu0 %826
        %830 = vset.pattern.permute.xlu0 0
        %831 = vperm.xlu0 %830, %v793
        %v832 = vpop.permute.xlu0 %831
        %v834 = vmul.f32 %v822, %v827
        %v835 = vmul.f32 %v823, %v832
        %837 = vset.pattern.permute.xlu0 0
        %838 = vperm.xlu0 %837, %v794
        %v839 = vpop.permute.xlu0 %838
        %842 = vset.pattern.permute.xlu0 0
        %843 = vperm.xlu0 %842, %v795
        %v844 = vpop.permute.xlu0 %843
        %v846 = vadd.f32 %v834, %v839
        %v847 = vadd.f32 %v835, %v844
        %848 = vxpose.xlu0.b32.start [1/16] %v724, 128
        %849 = vxpose.xlu0.b32.cont [2/16] %v725, 128
        %850 = vxpose.xlu0.b32.cont [3/16] 0.0, 128
        %851 = vxpose.xlu0.b32.cont [4/16] 0.0, 128
        %852 = vxpose.xlu0.b32.cont [5/16] 0.0, 128
        %853 = vxpose.xlu0.b32.cont [6/16] 0.0, 128
        %854 = vxpose.xlu0.b32.cont [7/16] 0.0, 128
        %855 = vxpose.xlu0.b32.cont [8/16] 0.0, 128
        %856 = vxpose.xlu0.b32.cont [9/16] 0.0, 128
        %857 = vxpose.xlu0.b32.cont [10/16] 0.0, 128
        %858 = vxpose.xlu0.b32.cont [11/16] 0.0, 128
        %859 = vxpose.xlu0.b32.cont [12/16] 0.0, 128
        %860 = vxpose.xlu0.b32.cont [13/16] 0.0, 128
        %861 = vxpose.xlu0.b32.cont [14/16] 0.0, 128
        %862 = vxpose.xlu0.b32.cont [15/16] 0.0, 128
        %863 = vxpose.xlu0.b32.end [16/16] 0.0, 128
        %v864 = vpop.trf.xlu0
        %v865 = vpop.trf.xlu0
        %v866 = vpop.trf.xlu0
        %v867 = vpop.trf.xlu0
        %v868 = vpop.trf.xlu0
        %v869 = vpop.trf.xlu0
        %v870 = vpop.trf.xlu0
        %v871 = vpop.trf.xlu0
        %v872 = vpop.trf.xlu0
        %v873 = vpop.trf.xlu0
        %v874 = vpop.trf.xlu0
        %v875 = vpop.trf.xlu0
        %v876 = vpop.trf.xlu0
        %v877 = vpop.trf.xlu0
        %v878 = vpop.trf.xlu0
        %v879 = vpop.trf.xlu0
        %v880 = vpack.c.bf16 %v864, %v864
        %v881 = vpack.c.bf16 %v787, %v786
        %vm882 = vcmask 130048
        %v884 = vsel %vm882, %v880, 0
        %886 = vmatprep.subr.bf16.mxu0 0
        %887 = vmatpush1.bf16.msra.mxu0 %v881
        %888 = vmatprep.subr.bf16.mxu0 0
        %889 = vmatpush1.bf16.msra.mxu0 0
        %890 = vmatprep.subr.bf16.mxu0 0
        %891 = vmatpush1.bf16.msra.mxu0 0
        %892 = vmatprep.subr.bf16.mxu0 0
        %893 = vmatpush1.bf16.msra.mxu0 0
        %894 = vmatprep.subr.bf16.mxu0 0
        %895 = vmatpush1.bf16.msra.mxu0 0
        %896 = vmatprep.subr.bf16.mxu0 0
        %897 = vmatpush1.bf16.msra.mxu0 0
        %898 = vmatprep.subr.bf16.mxu0 0
        %899 = vmatpush1.bf16.msra.mxu0 0
        %900 = vmatprep.subr.bf16.mxu0 0
        %901 = vmatpush1.bf16.msra.mxu0 0
        %902 = vmatprep.subr.bf16.mxu0 0
        %903 = vmatpush1.bf16.msra.mxu0 0
        %904 = vmatprep.subr.bf16.mxu0 0
        %905 = vmatpush1.bf16.msra.mxu0 0
        %906 = vmatprep.subr.bf16.mxu0 0
        %907 = vmatpush1.bf16.msra.mxu0 0
        %908 = vmatprep.subr.bf16.mxu0 0
        %909 = vmatpush1.bf16.msra.mxu0 0
        %910 = vmatprep.subr.bf16.mxu0 0
        %911 = vmatpush1.bf16.msra.mxu0 0
        %912 = vmatprep.subr.bf16.mxu0 0
        %913 = vmatpush1.bf16.msra.mxu0 0
        %914 = vmatprep.subr.bf16.mxu0 0
        %915 = vmatpush1.bf16.msra.mxu0 0
        %916 = vmatprep.subr.bf16.mxu0 0
        %917 = vmatpush1.bf16.msra.mxu0 0
        %918 = vmatprep.mubr.bf16.mxu0 0
        %919 = vmatmul.mubr.bf16.gmra.mrb[0].mxu0 %v884
        %v920 = vpop.f32.mrb[0].mxu0
        %v921 = vadd.f32 0.0, %v920
        %v922 = vpop.f32.mrb[0].mxu0
        %v923 = vpop.f32.mrb[0].mxu0
        %v924 = vpop.f32.mrb[0].mxu0
        %925 = vdwg.mxu0
        %v926 = vmul.f32 %v921, 0.25
        %v927 = vsel %vm734, %v926, -inf
        %928 = vmax.xlane.f32.xlu0 %v927
        %v929 = vpop.xlane.xlu0 %928
        %v930 = vsub.f32 %v926, %v929
        %v931 = vmul.f32 %v930, 1.442695
        %v932 = vpow.pop %v931
        %v933 = vsel %vm734, %v932, 0.0
        %934 = vadd.xlane.f32.xlu0 %v933
        %v935 = vpop.xlane.xlu0 %934
        %v936 = vrcp.pop %v935
        %v937 = vmul.f32 1.0, %v936
        %v938 = vmul.f32 %v932, %v937
        %939 = vst.msk [vmem:[%s402] sm:$0xff] %vm734, %v938
        %v940 = vpack.c.bf16 %v847, %v846
        %v941 = vpack.c.bf16 %v938, %v938
        %v943 = vsel %vm734, %v940, 0
        %v946 = vsel %vm734, %v941, 0
        %948 = vmatprep.subr.bf16.mxu0 0
        %949 = vmatpush1.bf16.xpose.msra.mxu0 %v946
        %950 = vmatprep.subr.bf16.mxu0 0
        %951 = vmatpush1.bf16.xpose.msra.mxu0 0
        %952 = vmatprep.subr.bf16.mxu0 0
        %953 = vmatpush1.bf16.xpose.msra.mxu0 0
        %954 = vmatprep.subr.bf16.mxu0 0
        %955 = vmatpush1.bf16.xpose.msra.mxu0 0
        %956 = vmatprep.subr.bf16.mxu0 0
        %957 = vmatpush1.bf16.xpose.msra.mxu0 0
        %958 = vmatprep.subr.bf16.mxu0 0
        %959 = vmatpush1.bf16.xpose.msra.mxu0 0
        %960 = vmatprep.subr.bf16.mxu0 0
        %961 = vmatpush1.bf16.xpose.msra.mxu0 0
        %962 = vmatprep.subr.bf16.mxu0 0
        %963 = vmatpush1.bf16.xpose.msra.mxu0 0
        %964 = vmatprep.subr.bf16.mxu0 0
        %965 = vmatpush1.bf16.xpose.msra.mxu0 0
        %966 = vmatprep.subr.bf16.mxu0 0
        %967 = vmatpush1.bf16.xpose.msra.mxu0 0
        %968 = vmatprep.subr.bf16.mxu0 0
        %969 = vmatpush1.bf16.xpose.msra.mxu0 0
        %970 = vmatprep.subr.bf16.mxu0 0
        %971 = vmatpush1.bf16.xpose.msra.mxu0 0
        %972 = vmatprep.subr.bf16.mxu0 0
        %973 = vmatpush1.bf16.xpose.msra.mxu0 0
        %974 = vmatprep.subr.bf16.mxu0 0
        %975 = vmatpush1.bf16.xpose.msra.mxu0 0
        %976 = vmatprep.subr.bf16.mxu0 0
        %977 = vmatpush1.bf16.xpose.msra.mxu0 0
        %978 = vmatprep.subr.bf16.mxu0 0
        %979 = vmatpush1.bf16.xpose.msra.mxu0 0
        %980 = vmatprep.mubr.bf16.mxu0 0
        %981 = vmatmul.mubr.bf16.gmra.mrb[0].mxu0 %v943
        %v982 = vpop.f32.mrb[0].mxu0
        %v983 = vadd.f32 0.0, %v982
        %v984 = vpop.f32.mrb[0].mxu0
        %v985 = vpop.f32.mrb[0].mxu0
        %v986 = vadd.f32 0.0, %v985
        %v987 = vpop.f32.mrb[0].mxu0
        %988 = vdwg.mxu0
        %s989 = scalar_lea.vmem [#allocation3], %s722
        %990 = vst.msk [vmem:[%s989] sm:$0xff] %vm734, %v983
        %991 = vst.msk [vmem:[%s989 + $0x8] sm:$0xff] %vm734, %v986
        %p992 = scmp.eq.s32.totalorder %s34, 3
        // Predicated region
        $region65: #{tpu_custom_call.1} parent=59 // pred_check
          %p993 = pneg %p992
        $region66: #{tpu_custom_call.1} parent=59 // pred_check_branch
          %995 = sbr.rel (%p993) target = $region68
        $region67: #{tpu_custom_call.1} parent=59 // pred_region
          %v996 = vld [vmem:[#allocation3] sm:$0xff]
          %v997 = vld [vmem:[#allocation3 + $0x8] sm:$0xff]
          %s998 = scalar_lea.vmem [#allocation3], 16
          %v999 = vld [vmem:[%s998] sm:$0xff]
          %v1000 = vld [vmem:[%s998 + $0x8] sm:$0xff]
          %s1001 = scalar_lea.vmem [#allocation3], 32
          %v1002 = vld [vmem:[%s1001] sm:$0xff]
          %v1003 = vld [vmem:[%s1001 + $0x8] sm:$0xff]
          %s1004 = scalar_lea.vmem [#allocation3], 48
          %v1005 = vld [vmem:[%s1004] sm:$0xff]
          %v1006 = vld [vmem:[%s1004 + $0x8] sm:$0xff]
          %1007 = vxpose.xlu0.b32.start [1/16] %v996, 128
          %1008 = vxpose.xlu0.b32.cont [2/16] %v997, 128
          %1009 = vxpose.xlu0.b32.cont [3/16] %v999, 128
          %1010 = vxpose.xlu0.b32.cont [4/16] %v1000, 128
          %1011 = vxpose.xlu0.b32.cont [5/16] %v1002, 128
          %1012 = vxpose.xlu0.b32.cont [6/16] %v1003, 128
          %1013 = vxpose.xlu0.b32.cont [7/16] %v1005, 128
          %1014 = vxpose.xlu0.b32.cont [8/16] %v1006, 128
          %1015 = vxpose.xlu0.b32.cont [9/16] 0.0, 128
          %1016 = vxpose.xlu0.b32.cont [10/16] 0.0, 128
          %1017 = vxpose.xlu0.b32.cont [11/16] 0.0, 128
          %1018 = vxpose.xlu0.b32.cont [12/16] 0.0, 128
          %1019 = vxpose.xlu0.b32.cont [13/16] 0.0, 128
          %1020 = vxpose.xlu0.b32.cont [14/16] 0.0, 128
          %1021 = vxpose.xlu0.b32.cont [15/16] 0.0, 128
          %1022 = vxpose.xlu0.b32.end [16/16] 0.0, 128
          %v1023 = vpop.trf.xlu0
          %v1024 = vpop.trf.xlu0
          %v1025 = vpop.trf.xlu0
          %v1026 = vpop.trf.xlu0
          %v1027 = vpop.trf.xlu0
          %v1028 = vpop.trf.xlu0
          %v1029 = vpop.trf.xlu0
          %v1030 = vpop.trf.xlu0
          %v1031 = vpop.trf.xlu0
          %v1032 = vpop.trf.xlu0
          %v1033 = vpop.trf.xlu0
          %v1034 = vpop.trf.xlu0
          %v1035 = vpop.trf.xlu0
          %v1036 = vpop.trf.xlu0
          %v1037 = vpop.trf.xlu0
          %v1038 = vpop.trf.xlu0
          %v1039 = vpack.c.bf16 %v1023, %v1023
          %v1040 = vld [vmem:[%s8] sm:$0xf]
          %v1041 = vld [vmem:[%s8 + $0x4] sm:$0xf]
          %v1042 = vld [vmem:[%s8 + $0x8] sm:$0xf]
          %v1043 = vld [vmem:[%s8 + $0xc] sm:$0xf]
          %v1044 = vld [vmem:[%s8 + $0x10] sm:$0xf]
          %v1045 = vld [vmem:[%s8 + $0x14] sm:$0xf]
          %v1046 = vld [vmem:[%s8 + $0x18] sm:$0xf]
          %v1047 = vld [vmem:[%s8 + $0x1c] sm:$0xf]
          %v1048 = vld [vmem:[%s9] sm:$0x1]
          %v1050 = vlaneseq
          %v1051 = vshrl.u32 %v1050, 7
          %v1052 = vsub.s32 0, %v1051
          %v1053 = vrot.slane %v1048, %v1052
          %v1063 = vunpack.c.l.b16 %v1040
          %v1064 = vunpack.c.l.b16 %v1041
          %v1065 = vunpack.c.l.b16 %v1042
          %v1066 = vunpack.c.l.b16 %v1043
          %v1067 = vunpack.c.l.b16 %v1044
          %v1068 = vunpack.c.l.b16 %v1045
          %v1069 = vunpack.c.l.b16 %v1046
          %v1070 = vunpack.c.l.b16 %v1047
          %v1071 = vpack.c.b16 %v1064, %v1063
          %v1072 = vpack.c.b16 %v1066, %v1065
          %v1073 = vpack.c.b16 %v1068, %v1067
          %v1074 = vpack.c.b16 %v1070, %v1069
          %vm1079 = vcmask 523264
          %v1081 = vsel %vm1079, %v1039, 0
          %1083 = vmatprep.subr.bf16.mxu0 0
          %1084 = vmatpush1.bf16.msra.mxu0 %v1071
          %1085 = vmatprep.subr.bf16.mxu0 0
          %1086 = vmatpush1.bf16.msra.mxu0 %v1072
          %1087 = vmatprep.subr.bf16.mxu0 0
          %1088 = vmatpush1.bf16.msra.mxu0 %v1073
          %1089 = vmatprep.subr.bf16.mxu0 0
          %1090 = vmatpush1.bf16.msra.mxu0 %v1074
          %1091 = vmatprep.subr.bf16.mxu0 0
          %1092 = vmatpush1.bf16.msra.mxu0 0
          %1093 = vmatprep.subr.bf16.mxu0 0
          %1094 = vmatpush1.bf16.msra.mxu0 0
          %1095 = vmatprep.subr.bf16.mxu0 0
          %1096 = vmatpush1.bf16.msra.mxu0 0
          %1097 = vmatprep.subr.bf16.mxu0 0
          %1098 = vmatpush1.bf16.msra.mxu0 0
          %1099 = vmatprep.subr.bf16.mxu0 0
          %1100 = vmatpush1.bf16.msra.mxu0 0
          %1101 = vmatprep.subr.bf16.mxu0 0
          %1102 = vmatpush1.bf16.msra.mxu0 0
          %1103 = vmatprep.subr.bf16.mxu0 0
          %1104 = vmatpush1.bf16.msra.mxu0 0
          %1105 = vmatprep.subr.bf16.mxu0 0
          %1106 = vmatpush1.bf16.msra.mxu0 0
          %1107 = vmatprep.subr.bf16.mxu0 0
          %1108 = vmatpush1.bf16.msra.mxu0 0
          %1109 = vmatprep.subr.bf16.mxu0 0
          %1110 = vmatpush1.bf16.msra.mxu0 0
          %1111 = vmatprep.subr.bf16.mxu0 0
          %1112 = vmatpush1.bf16.msra.mxu0 0
          %1113 = vmatprep.subr.bf16.mxu0 0
          %1114 = vmatpush1.bf16.msra.mxu0 0
          %1115 = vmatprep.mubr.bf16.mxu0 0
          %1116 = vmatmul.mubr.bf16.gmra.mrb[0].mxu0 %v1081
          %v1117 = vpop.f32.mrb[0].mxu0
          %v1118 = vadd.f32 %v1053, %v1117
          %v1119 = vpop.f32.mrb[0].mxu0
          %v1120 = vpop.f32.mrb[0].mxu0
          %v1121 = vpop.f32.mrb[0].mxu0
          %1122 = vdwg.mxu0
          %vm1123 = vcmask 261120
          %1124 = vst.msk [vmem:[%s395] sm:$0xff] %vm1123, %v1118
        $region68: #{tpu_custom_call.1} parent=59 // pred_fallthru
          _
        %s1125 = sand.u32 %s264, 1
        %s1126 = scalar_lea.sflag [#allocation5], %s1125
        %s1127 = sand.u32 %s264, 1
        %s1128 = smul.addr %s1127, 8
        %s1129 = scalar_lea.vmem [#allocation4], %s1128
        %s1130 = sand.u32 %s292, 1
        %s1131 = scalar_lea.sflag [#allocation7], %s1130
        %s1132 = sand.u32 %s292, 1
        %s1133 = smul.addr %s1132, 8
        %s1134 = scalar_lea.vmem [#allocation6], %s1133
        // Predicated region
        $region69: #{tpu_custom_call.1} parent=59 // pred_check
          %p1135 = pneg %p274
        $region70: #{tpu_custom_call.1} parent=59 // pred_check_branch
          %1137 = sbr.rel (%p1135) target = $region72
        $region71: #{tpu_custom_call.1} parent=59 // pred_region
          %s1139 = ssub.s32 128, 128
          %1140 = vsyncadd %s1126, %s1139
          %s1141 = smul.addr %s33, 128
          %s1142 = scalar_lea.hbm %s10, %s1141
          %s1144 = sshll.u32 %s1129, 4
          %s1145 = int_to_ptr.vmem [resolvable:$true] %s1144
          %1147 = dma.vmem_to_hbm [thread:$0]  %s1145, 128, %s1142, %s1126
        $region72: #{tpu_custom_call.1} parent=59 // pred_fallthru
          _
        // Predicated region
        $region73: #{tpu_custom_call.1} parent=59 // pred_check
          %p1148 = pneg %p302
        $region74: #{tpu_custom_call.1} parent=59 // pred_check_branch
          %1150 = sbr.rel (%p1148) target = $region76
        $region75: #{tpu_custom_call.1} parent=59 // pred_region
          %s1152 = ssub.s32 128, 128
          %1153 = vsyncadd %s1131, %s1152
          %s1154 = smul.addr %s33, 4
          %s1155 = sadd.s32 %s34, %s1154
          %s1156 = smul.addr %s1155, 128
          %s1157 = scalar_lea.hbm %s11, %s1156
          %s1159 = sshll.u32 %s1134, 4
          %s1160 = int_to_ptr.vmem [resolvable:$true] %s1159
          %1162 = dma.vmem_to_hbm [thread:$0]  %s1160, 128, %s1157, %s1131
        $region76: #{tpu_custom_call.1} parent=59 // pred_fallthru
          _
      $region60: #{tpu_custom_call.1} parent=5 // pred_fallthru
        _
      %p1163 = scmp.le.s32.totalorder 2, %s24
      // Predicated region
      $region77: #{tpu_custom_call.1} parent=5 // pred_check
        %p1164 = pneg %p1163
      $region78: #{tpu_custom_call.1} parent=5 // pred_check_branch
        %1166 = sbr.rel (%p1164) target = $region80
      $region79: #{tpu_custom_call.1} parent=5 // pred_region
        %s1167 = ssub.s32 %s24, 2
        // Predicated region
        $region81: #{tpu_custom_call.1} parent=79 // pred_check
          %p1168 = pneg %p280
        $region82: #{tpu_custom_call.1} parent=79 // pred_check_branch
          %1170 = sbr.rel (%p1168) target = $region84
        $region83: #{tpu_custom_call.1} parent=79 // pred_region
          %s1171 = sand.u32 %s265, 1
          %s1172 = scalar_lea.sflag [#allocation5], %s1171
          %s1173 = sand.u32 %s265, 1
          %s1174 = smul.addr %s1173, 8
          %s1175 = scalar_lea.vmem [#allocation4], %s1174
          %1176 = dma.done %s1172, 128
        $region84: #{tpu_custom_call.1} parent=79 // pred_fallthru
          _
        // Predicated region
        $region85: #{tpu_custom_call.1} parent=79 // pred_check
          %p1177 = pneg %p308
        $region86: #{tpu_custom_call.1} parent=79 // pred_check_branch
          %1179 = sbr.rel (%p1177) target = $region88
        $region87: #{tpu_custom_call.1} parent=79 // pred_region
          %s1180 = sand.u32 %s293, 1
          %s1181 = scalar_lea.sflag [#allocation7], %s1180
          %s1182 = sand.u32 %s293, 1
          %s1183 = smul.addr %s1182, 8
          %s1184 = scalar_lea.vmem [#allocation6], %s1183
          %1185 = dma.done %s1181, 128
        $region88: #{tpu_custom_call.1} parent=79 // pred_fallthru
          _
      $region80: #{tpu_custom_call.1} parent=5 // pred_fallthru
        _
    $region6: #{tpu_custom_call.1} parent=1 // loop_footer
      %s28 = sadd.s32 1, %s24
    $region7: #{tpu_custom_call.1} parent=1 // loop_footer_branch
      %23 = sbr.rel target = $region3
    $region8: #{tpu_custom_call.1} parent=1 // loop_exit
      _
    %1186 = vsyncpa [#allocation5], 1
    %s1187 = scalar_lea.sflag [#allocation5], 1
    %1188 = vsyncpa %s1187, 1
    %1189 = vsyncpa [#allocation7], 1
    %s1190 = scalar_lea.sflag [#allocation7], 1
    %1191 = vsyncpa %s1190, 1

</llo_original>
